<compile_context>
chip_gen: v7x
topology: tpu7x:2x2x1
jax: 0.10.0
libtpu: 0.0.40
codegen_flags: <defaults>
</compile_context>

<pallas_src>
import functools

import jax
import jax.numpy as jnp
import numpy as np
from jax.experimental import pallas as pl
from jax.experimental.pallas import tpu as pltpu


def lstm_lm_kernel(gates_x_ref, tgt_ref, w_hh_ref, emit_w_ref, emit_b_ref,
                   marg_ref, h_ref, c_ref, *,
                   hidden_dim, block_steps, total_steps):
    """One grid step = `block_steps` sequential LSTM + emit-log-lik steps."""
    t_blk = pl.program_id(0)
    H = hidden_dim

    @pl.when(t_blk == 0)
    def _():
        marg_ref[...] = jnp.zeros_like(marg_ref)
        h_ref[...] = jnp.zeros_like(h_ref)
        c_ref[...] = jnp.zeros_like(c_ref)

    w_hh = w_hh_ref[...]        # (H, 4H)  matmul dtype (bf16 by default)
    emit_w = emit_w_ref[...]    # (H, V)   matmul dtype
    emit_b = emit_b_ref[...]    # (1, V)   f32
    mm_dtype = w_hh.dtype

    def step(tt, carry):
        h, c, acc = carry                      # (N,H), (N,H), (N,1) all f32
        gx = gates_x_ref[tt]                   # (N,4H) f32: x@W_ih^T + b_ih + b_hh
        gates = gx + jnp.dot(h.astype(mm_dtype), w_hh,
                             preferred_element_type=jnp.float32)
        # LSTMCell gate order (i, f, g, o)  -- elementwise kept in f32
        i = jax.nn.sigmoid(gates[:, 0:H])
        f = jax.nn.sigmoid(gates[:, H:2 * H])
        g = jnp.tanh(gates[:, 2 * H:3 * H])
        o = jax.nn.sigmoid(gates[:, 3 * H:4 * H])
        c_new = f * c + i * g
        h_new = o * jnp.tanh(c_new)

        # emit linear + log_softmax + gather(target) -- no dense one-hot.
        logits = (jnp.dot(h_new.astype(mm_dtype), emit_w,
                          preferred_element_type=jnp.float32)
                  + emit_b)                                         # (N, V) f32
        m = jnp.max(logits, axis=-1, keepdims=True)
        lse = m + jnp.log(jnp.sum(jnp.exp(logits - m), axis=-1, keepdims=True))
        tgt = tgt_ref[tt]                                           # (N, 1) int32
        vocab_iota = jax.lax.broadcasted_iota(jnp.int32, logits.shape, 1)
        tgt_logit = jnp.sum(jnp.where(vocab_iota == tgt, logits, 0.0),
                            axis=-1, keepdims=True)                 # (N, 1)
        emit_ll = tgt_logit - lse                                   # (N, 1)
        return h_new, c_new, acc + emit_ll

    carry0 = (h_ref[...], c_ref[...], marg_ref[...])
    h, c, acc = jax.lax.fori_loop(0, block_steps, step, carry0, unroll=True)

    h_ref[...] = h
    c_ref[...] = c
    marg_ref[...] = acc

    @pl.when(t_blk == pl.num_programs(0) - 1)
    def _():
        marg_ref[...] = marg_ref[...] / float(total_steps)


def rnn_forward(words, params, *, hidden_dim, embed_dim, vocab_size,
                block_steps=8, matmul_dtype=jnp.bfloat16):
    """Pallas RNN.forward (type='lstm', compute_emit=False).

    words: (N, T) int32 token ids.  Returns (emit_marginal, (h_T, c_T)).
    """
    N, T = words.shape
    Tm1 = T - 1
    H = hidden_dim

    # Time-block size: must tile T-1 evenly and be 8-aligned (sublane tile of
    # the (TT, N, 1) target block) unless it covers the full time extent.
    bs = min(block_steps, Tm1)
    if Tm1 % bs != 0 or (bs % 8 != 0 and bs != Tm1):
        bs = Tm1
    num_blocks = Tm1 // bs

    # --- glue: embedding lookup (== embed_input + dropout(p=0) + permute) ---
    x = params["embed"][words[:, :-1]].astype(jnp.float32)        # (N, T-1, E)
    x = jnp.transpose(x, (1, 0, 2))                               # (T-1, N, E)

    # Hoisted input projection: one big MXU-friendly matmul outside the
    # sequential recurrence (gates_x = x @ W_ih^T + b_ih + b_hh).
    w_ih_t = params["w_ih"].T.astype(matmul_dtype)                # (E, 4H)
    bias = (params["b_ih"] + params["b_hh"]).astype(jnp.float32)  # (4H,)
    gates_x = jnp.dot(x.reshape(Tm1 * N, embed_dim).astype(matmul_dtype),
                      w_ih_t, preferred_element_type=jnp.float32)
    gates_x = (gates_x + bias[None, :]).reshape(Tm1, N, 4 * H)

    # int32 targets instead of a dense (T-1, N, V) one-hot tensor.
    targets = jnp.transpose(words[:, 1:], (1, 0)).astype(jnp.int32)[..., None]

    w_hh_t = params["w_hh"].T.astype(matmul_dtype)                # (H, 4H)
    emit_w_t = params["emit_w"].T.astype(matmul_dtype)            # (H, V)
    emit_b = params["emit_b"].astype(jnp.float32)[None, :]        # (1, V)

    kernel = functools.partial(lstm_lm_kernel, hidden_dim=H,
                               block_steps=bs, total_steps=Tm1)

    # TODO(synk): for realistic vocab sizes, tile the emit matmul over V chunks
    # with an online LSE so emit_w is never fully (double-)buffered in VMEM
    # (required on v7x's 64 MiB VMEM); at these sizes it stays resident.
    # TODO(synk): for large N, add a leading "parallel" batch grid axis so the
    # two v7x TensorCores each process an independent slice of the batch.
    marg, h, c = pl.pallas_call(
        kernel,
        out_shape=(
            jax.ShapeDtypeStruct((N, 1), jnp.float32),
            jax.ShapeDtypeStruct((N, H), jnp.float32),
            jax.ShapeDtypeStruct((N, H), jnp.float32),
        ),
        grid_spec=pltpu.PrefetchScalarGridSpec(
            num_scalar_prefetch=0,
            grid=(num_blocks,),
            in_specs=[
                pl.BlockSpec((bs, N, 4 * H), lambda t: (t, 0, 0)),
                pl.BlockSpec((bs, N, 1), lambda t: (t, 0, 0)),
                pl.BlockSpec((H, 4 * H), lambda t: (0, 0)),
                pl.BlockSpec((H, vocab_size), lambda t: (0, 0)),
                pl.BlockSpec((1, vocab_size), lambda t: (0, 0)),
            ],
            out_specs=[
                pl.BlockSpec((N, 1), lambda t: (0, 0)),
                pl.BlockSpec((N, H), lambda t: (0, 0)),
                pl.BlockSpec((N, H), lambda t: (0, 0)),
            ],
        ),
        compiler_params=pltpu.CompilerParams(
            dimension_semantics=("arbitrary",)),   # sequential recurrence
    )(gates_x, targets, w_hh_t, emit_w_t, emit_b)

    return marg[:, 0], (h, c)


def rnn_forward_ref(words, params, *, hidden_dim, vocab_size):
    """Pure-JAX f32 reference (mirrors the PyTorch code) for validation."""
    N, T = words.shape
    emb = params["embed"][words[:, :-1]].astype(jnp.float32)      # (N, T-1, E)
    H = hidden_dim

    def step(carry, xs):
        h, c, acc = carry
        x, tgt = xs                                               # (N, E), (N,)
        gates = (x @ params["w_ih"].T + params["b_ih"]
                 + h @ params["w_hh"].T + params["b_hh"])
        i = jax.nn.sigmoid(gates[:, 0:H])
        f = jax.nn.sigmoid(gates[:, H:2 * H])
        g = jnp.tanh(gates[:, 2 * H:3 * H])
        o = jax.nn.sigmoid(gates[:, 3 * H:4 * H])
        c_new = f * c + i * g
        h_new = o * jnp.tanh(c_new)
        logits = h_new @ params["emit_w"].T + params["emit_b"]
        logp = jax.nn.log_softmax(logits, axis=-1)
        ll = jnp.take_along_axis(logp, tgt[:, None], axis=1)[:, 0]
        return (h_new, c_new, acc + ll), None

    h0 = jnp.zeros((N, H), jnp.float32)
    c0 = jnp.zeros((N, H), jnp.float32)
    acc0 = jnp.zeros((N,), jnp.float32)
    xs = (jnp.transpose(emb, (1, 0, 2)), jnp.transpose(words[:, 1:], (1, 0)))
    (h, c, acc), _ = jax.lax.scan(step, (h0, c0, acc0), xs)
    return acc / (T - 1), (h, c)


def init_params(key, vocab_size, embed_dim, hidden_dim, initrange=1.0):
    ks = jax.random.split(key, 6)
    k_lstm = 1.0 / np.sqrt(hidden_dim)
    return {
        "embed": jax.random.uniform(ks[0], (vocab_size, embed_dim),
                                    jnp.float32, -initrange, initrange),
        "w_ih": jax.random.uniform(ks[1], (4 * hidden_dim, embed_dim),
                                   jnp.float32, -k_lstm, k_lstm),
        "w_hh": jax.random.uniform(ks[2], (4 * hidden_dim, hidden_dim),
                                   jnp.float32, -k_lstm, k_lstm),
        "b_ih": jax.random.uniform(ks[3], (4 * hidden_dim,),
                                   jnp.float32, -k_lstm, k_lstm),
        "b_hh": jax.random.uniform(ks[4], (4 * hidden_dim,),
                                   jnp.float32, -k_lstm, k_lstm),
        "emit_w": jax.random.uniform(ks[5], (vocab_size, hidden_dim),
                                     jnp.float32, -initrange, initrange),
        "emit_b": jnp.zeros((vocab_size,), jnp.float32),   # emit.bias.zero_()
    }


if __name__ == "__main__":
    VOCAB, EMBED, HIDDEN = 256, 64, 64
    N, T = 8, 17          # 16 sequence steps after the leading token

    key = jax.random.PRNGKey(0)
    k_param, k_words = jax.random.split(key)
    params = init_params(k_param, VOCAB, EMBED, HIDDEN)
    words = jax.random.randint(k_words, (N, T), 0, VOCAB, dtype=jnp.int32)

    marg_ref, (h_ref, c_ref) = rnn_forward_ref(
        words, params, hidden_dim=HIDDEN, vocab_size=VOCAB)

    # 1) strict correctness check with f32 matmul operands.
    marg32, (h32, c32) = rnn_forward(
        words, params, hidden_dim=HIDDEN, embed_dim=EMBED, vocab_size=VOCAB,
        matmul_dtype=jnp.float32)
    jax.block_until_ready((marg32, h32, c32))
    np.testing.assert_allclose(np.asarray(marg32), np.asarray(marg_ref),
                               rtol=5e-4, atol=1e-4)
    np.testing.assert_allclose(np.asarray(h32), np.asarray(h_ref),
                               rtol=5e-4, atol=1e-4)
    np.testing.assert_allclose(np.asarray(c32), np.asarray(c_ref),
                               rtol=5e-4, atol=1e-4)

    # 2) default performance path: bf16 MXU operands, f32 elementwise/LSE.
    marg_bf, (h_bf, c_bf) = rnn_forward(
        words, params, hidden_dim=HIDDEN, embed_dim=EMBED, vocab_size=VOCAB)
    jax.block_until_ready((marg_bf, h_bf, c_bf))
    np.testing.assert_allclose(np.asarray(marg_bf), np.asarray(marg_ref),
                               rtol=5e-2, atol=5e-2)
    np.testing.assert_allclose(np.asarray(h_bf), np.asarray(h_ref),
                               rtol=5e-2, atol=5e-2)
    np.testing.assert_allclose(np.asarray(c_bf), np.asarray(c_ref),
                               rtol=5e-2, atol=5e-2)

    print("KERNEL_OK")
</pallas_src>

<mosaic_0001>
module attributes {stable_mosaic.version = 11 : i64} {
  func.func @lstm_lm_kernel(%arg0: i32, %arg1: memref<8x8x256xf32, #tpu.memory_space<vmem>>, %arg2: memref<8x8x1xi32, #tpu.memory_space<vmem>>, %arg3: memref<64x256xf32, #tpu.memory_space<vmem>>, %arg4: memref<64x256xf32, #tpu.memory_space<vmem>>, %arg5: memref<1x256xf32, #tpu.memory_space<vmem>>, %arg6: memref<8x1xf32, #tpu.memory_space<vmem>>, %arg7: memref<8x64xf32, #tpu.memory_space<vmem>>, %arg8: memref<8x64xf32, #tpu.memory_space<vmem>>) attributes {dimension_semantics = [#tpu.dimension_semantics<arbitrary>], iteration_bounds = array<i64: 2>, scalar_prefetch = 0 : i64, scratch_operands = 0 : i64, tpu.core_type = #tpu.core_type<tc>, window_params = [{transform_indices = @transform_0, window_bounds = array<i64: 8, 8, 256>}, {transform_indices = @transform_1, window_bounds = array<i64: 8, 8, 1>}, {pipeline_mode = #tpu.pipeline_mode<synchronous>, transform_indices = @transform_2, window_bounds = array<i64: 64, 256>}, {pipeline_mode = #tpu.pipeline_mode<synchronous>, transform_indices = @transform_3, window_bounds = array<i64: 64, 256>}, {pipeline_mode = #tpu.pipeline_mode<synchronous>, transform_indices = @transform_4, window_bounds = array<i64: 1, 256>}, {pipeline_mode = #tpu.pipeline_mode<synchronous>, transform_indices = @transform_5, window_bounds = array<i64: 8, 1>}, {pipeline_mode = #tpu.pipeline_mode<synchronous>, transform_indices = @transform_6, window_bounds = array<i64: 8, 64>}, {pipeline_mode = #tpu.pipeline_mode<synchronous>, transform_indices = @transform_7, window_bounds = array<i64: 8, 64>}]} {
    %c0_i32 = arith.constant 0 : i32
    %0 = arith.cmpi eq, %arg0, %c0_i32 : i32
    %1 = arith.extui %0 : i1 to i32
    %c0_i32_0 = arith.constant 0 : i32
    %2 = arith.cmpi ne, %1, %c0_i32_0 : i32
    scf.if %2 {
      %cst_124 = arith.constant 0.000000e+00 : f32
      %447 = vector.broadcast %cst_124 : f32 to vector<8x1xf32>
      %c0_125 = arith.constant 0 : index
      %c0_126 = arith.constant 0 : index
      %448 = vector.load %arg6[%c0_125, %c0_126] : memref<8x1xf32, #tpu.memory_space<vmem>>, vector<8x1xf32>
      tpu.vector_store %arg6[%c0_125, %c0_126], %447 {strides = array<i32>} : memref<8x1xf32, #tpu.memory_space<vmem>>, vector<8x1xf32>,
      %cst_127 = arith.constant 0.000000e+00 : f32
      %449 = vector.broadcast %cst_127 : f32 to vector<8x64xf32>
      %c0_128 = arith.constant 0 : index
      %c0_129 = arith.constant 0 : index
      %450 = vector.load %arg7[%c0_128, %c0_129] : memref<8x64xf32, #tpu.memory_space<vmem>>, vector<8x64xf32>
      tpu.vector_store %arg7[%c0_128, %c0_129], %449 {strides = array<i32>} : memref<8x64xf32, #tpu.memory_space<vmem>>, vector<8x64xf32>,
      %cst_130 = arith.constant 0.000000e+00 : f32
      %451 = vector.broadcast %cst_130 : f32 to vector<8x64xf32>
      %c0_131 = arith.constant 0 : index
      %c0_132 = arith.constant 0 : index
      %452 = vector.load %arg8[%c0_131, %c0_132] : memref<8x64xf32, #tpu.memory_space<vmem>>, vector<8x64xf32>
      tpu.vector_store %arg8[%c0_131, %c0_132], %451 {strides = array<i32>} : memref<8x64xf32, #tpu.memory_space<vmem>>, vector<8x64xf32>,
    } else {
    }
    %c0 = arith.constant 0 : index
    %c0_1 = arith.constant 0 : index
    %3 = vector.load %arg3[%c0, %c0_1] : memref<64x256xf32, #tpu.memory_space<vmem>>, vector<64x256xf32>
    %c0_2 = arith.constant 0 : index
    %c0_3 = arith.constant 0 : index
    %4 = vector.load %arg4[%c0_2, %c0_3] : memref<64x256xf32, #tpu.memory_space<vmem>>, vector<64x256xf32>
    %c0_4 = arith.constant 0 : index
    %c0_5 = arith.constant 0 : index
    %5 = vector.load %arg5[%c0_4, %c0_5] : memref<1x256xf32, #tpu.memory_space<vmem>>, vector<1x256xf32>
    %c0_6 = arith.constant 0 : index
    %c0_7 = arith.constant 0 : index
    %6 = vector.load %arg7[%c0_6, %c0_7] : memref<8x64xf32, #tpu.memory_space<vmem>>, vector<8x64xf32>
    %c0_8 = arith.constant 0 : index
    %c0_9 = arith.constant 0 : index
    %7 = vector.load %arg8[%c0_8, %c0_9] : memref<8x64xf32, #tpu.memory_space<vmem>>, vector<8x64xf32>
    %c0_10 = arith.constant 0 : index
    %c0_11 = arith.constant 0 : index
    %8 = vector.load %arg6[%c0_10, %c0_11] : memref<8x1xf32, #tpu.memory_space<vmem>>, vector<8x1xf32>
    %c0_i32_12 = arith.constant 0 : i32
    %9 = arith.index_cast %c0_i32_12 : i32 to index
    %c0_13 = arith.constant 0 : index
    %c0_14 = arith.constant 0 : index
    %10 = vector.load %arg1[%9, %c0_13, %c0_14] : memref<8x8x256xf32, #tpu.memory_space<vmem>>, vector<1x8x256xf32>
    %11 = vector.shape_cast %10 : vector<1x8x256xf32> to vector<8x256xf32>
    %cst = arith.constant dense<0.000000e+00> : vector<8x256xf32>
    %12 = tpu.matmul %6, %3, %cst {dimension_numbers = #tpu.dot_dimension_numbers<[1], [0], [0], [1], [0, 0, 1, 1], [], []>} : vector<8x64xf32>, vector<64x256xf32>, vector<8x256xf32> -> vector<8x256xf32>
    %13 = arith.addf %11, %12 : vector<8x256xf32>
    %14 = vector.extract_strided_slice %13 {offsets = [0, 0], sizes = [8, 64], strides = [1, 1]} : vector<8x256xf32> to vector<8x64xf32>
    %15 = arith.negf %14 : vector<8x64xf32>
    %16 = math.exp %15 : vector<8x64xf32>
    %cst_15 = arith.constant 1.000000e+00 : f32
    %17 = vector.broadcast %cst_15 : f32 to vector<8x64xf32>
    %18 = arith.addf %17, %16 : vector<8x64xf32>
    %19 = arith.divf %17, %18 : vector<8x64xf32>
    %20 = vector.extract_strided_slice %13 {offsets = [0, 64], sizes = [8, 64], strides = [1, 1]} : vector<8x256xf32> to vector<8x64xf32>
    %21 = arith.negf %20 : vector<8x64xf32>
    %22 = math.exp %21 : vector<8x64xf32>
    %cst_16 = arith.constant 1.000000e+00 : f32
    %23 = vector.broadcast %cst_16 : f32 to vector<8x64xf32>
    %24 = arith.addf %23, %22 : vector<8x64xf32>
    %25 = arith.divf %23, %24 : vector<8x64xf32>
    %26 = vector.extract_strided_slice %13 {offsets = [0, 128], sizes = [8, 64], strides = [1, 1]} : vector<8x256xf32> to vector<8x64xf32>
    %27 = math.tanh %26 : vector<8x64xf32>
    %28 = vector.extract_strided_slice %13 {offsets = [0, 192], sizes = [8, 64], strides = [1, 1]} : vector<8x256xf32> to vector<8x64xf32>
    %29 = arith.negf %28 : vector<8x64xf32>
    %30 = math.exp %29 : vector<8x64xf32>
    %cst_17 = arith.constant 1.000000e+00 : f32
    %31 = vector.broadcast %cst_17 : f32 to vector<8x64xf32>
    %32 = arith.addf %31, %30 : vector<8x64xf32>
    %33 = arith.divf %31, %32 : vector<8x64xf32>
    %34 = arith.mulf %25, %7 : vector<8x64xf32>
    %35 = arith.mulf %19, %27 : vector<8x64xf32>
    %36 = arith.addf %34, %35 : vector<8x64xf32>
    %37 = math.tanh %36 : vector<8x64xf32>
    %38 = arith.mulf %33, %37 : vector<8x64xf32>
    %cst_18 = arith.constant dense<0.000000e+00> : vector<8x256xf32>
    %39 = tpu.matmul %38, %4, %cst_18 {dimension_numbers = #tpu.dot_dimension_numbers<[1], [0], [0], [1], [0, 0, 1, 1], [], []>} : vector<8x64xf32>, vector<64x256xf32>, vector<8x256xf32> -> vector<8x256xf32>
    %40 = vector.broadcast %5 : vector<1x256xf32> to vector<8x256xf32>
    %41 = arith.addf %39, %40 : vector<8x256xf32>
    %cst_19 = arith.constant dense<0xFF800000> : vector<8xf32>
    %42 = vector.multi_reduction <maximumf>, %41, %cst_19 [1] : vector<8x256xf32> to vector<8xf32>
    %43 = vector.shape_cast %42 : vector<8xf32> to vector<8x1xf32>
    %44 = vector.broadcast %43 : vector<8x1xf32> to vector<8x256xf32>
    %45 = arith.subf %41, %44 : vector<8x256xf32>
    %46 = math.exp %45 : vector<8x256xf32>
    %cst_20 = arith.constant dense<0.000000e+00> : vector<8xf32>
    %47 = vector.multi_reduction <add>, %46, %cst_20 [1] : vector<8x256xf32> to vector<8xf32>
    %48 = vector.shape_cast %47 : vector<8xf32> to vector<8x1xf32>
    %49 = math.log %48 : vector<8x1xf32>
    %50 = arith.addf %43, %49 : vector<8x1xf32>
    %51 = arith.index_cast %c0_i32_12 : i32 to index
    %c0_21 = arith.constant 0 : index
    %c0_22 = arith.constant 0 : index
    %52 = vector.load %arg2[%51, %c0_21, %c0_22] : memref<8x8x1xi32, #tpu.memory_space<vmem>>, vector<1x8x1xi32>
    %53 = vector.shape_cast %52 : vector<1x8x1xi32> to vector<8x1xi32>
    %54 = tpu.iota {dimensions = array<i32: 1>} : vector<8x256xi32>
    %55 = vector.broadcast %53 : vector<8x1xi32> to vector<8x256xi32>
    %56 = arith.cmpi eq, %54, %55 : vector<8x256xi32>
    %cst_23 = arith.constant 0.000000e+00 : f32
    %57 = vector.broadcast %cst_23 : f32 to vector<8x256xf32>
    %58 = arith.select %56, %41, %57 : vector<8x256xi1>, vector<8x256xf32>
    %cst_24 = arith.constant dense<0.000000e+00> : vector<8xf32>
    %59 = vector.multi_reduction <add>, %58, %cst_24 [1] : vector<8x256xf32> to vector<8xf32>
    %60 = vector.shape_cast %59 : vector<8xf32> to vector<8x1xf32>
    %61 = arith.subf %60, %50 : vector<8x1xf32>
    %62 = arith.addf %8, %61 : vector<8x1xf32>
    %c1_i32 = arith.constant 1 : i32
    %63 = arith.index_cast %c1_i32 : i32 to index
    %c0_25 = arith.constant 0 : index
    %c0_26 = arith.constant 0 : index
    %64 = vector.load %arg1[%63, %c0_25, %c0_26] : memref<8x8x256xf32, #tpu.memory_space<vmem>>, vector<1x8x256xf32>
    %65 = vector.shape_cast %64 : vector<1x8x256xf32> to vector<8x256xf32>
    %cst_27 = arith.constant dense<0.000000e+00> : vector<8x256xf32>
    %66 = tpu.matmul %38, %3, %cst_27 {dimension_numbers = #tpu.dot_dimension_numbers<[1], [0], [0], [1], [0, 0, 1, 1], [], []>} : vector<8x64xf32>, vector<64x256xf32>, vector<8x256xf32> -> vector<8x256xf32>
    %67 = arith.addf %65, %66 : vector<8x256xf32>
    %68 = vector.extract_strided_slice %67 {offsets = [0, 0], sizes = [8, 64], strides = [1, 1]} : vector<8x256xf32> to vector<8x64xf32>
    %69 = arith.negf %68 : vector<8x64xf32>
    %70 = math.exp %69 : vector<8x64xf32>
    %cst_28 = arith.constant 1.000000e+00 : f32
    %71 = vector.broadcast %cst_28 : f32 to vector<8x64xf32>
    %72 = arith.addf %71, %70 : vector<8x64xf32>
    %73 = arith.divf %71, %72 : vector<8x64xf32>
    %74 = vector.extract_strided_slice %67 {offsets = [0, 64], sizes = [8, 64], strides = [1, 1]} : vector<8x256xf32> to vector<8x64xf32>
    %75 = arith.negf %74 : vector<8x64xf32>
    %76 = math.exp %75 : vector<8x64xf32>
    %cst_29 = arith.constant 1.000000e+00 : f32
    %77 = vector.broadcast %cst_29 : f32 to vector<8x64xf32>
    %78 = arith.addf %77, %76 : vector<8x64xf32>
    %79 = arith.divf %77, %78 : vector<8x64xf32>
    %80 = vector.extract_strided_slice %67 {offsets = [0, 128], sizes = [8, 64], strides = [1, 1]} : vector<8x256xf32> to vector<8x64xf32>
    %81 = math.tanh %80 : vector<8x64xf32>
    %82 = vector.extract_strided_slice %67 {offsets = [0, 192], sizes = [8, 64], strides = [1, 1]} : vector<8x256xf32> to vector<8x64xf32>
    %83 = arith.negf %82 : vector<8x64xf32>
    %84 = math.exp %83 : vector<8x64xf32>
    %cst_30 = arith.constant 1.000000e+00 : f32
    %85 = vector.broadcast %cst_30 : f32 to vector<8x64xf32>
    %86 = arith.addf %85, %84 : vector<8x64xf32>
    %87 = arith.divf %85, %86 : vector<8x64xf32>
    %88 = arith.mulf %79, %36 : vector<8x64xf32>
    %89 = arith.mulf %73, %81 : vector<8x64xf32>
    %90 = arith.addf %88, %89 : vector<8x64xf32>
    %91 = math.tanh %90 : vector<8x64xf32>
    %92 = arith.mulf %87, %91 : vector<8x64xf32>
    %cst_31 = arith.constant dense<0.000000e+00> : vector<8x256xf32>
    %93 = tpu.matmul %92, %4, %cst_31 {dimension_numbers = #tpu.dot_dimension_numbers<[1], [0], [0], [1], [0, 0, 1, 1], [], []>} : vector<8x64xf32>, vector<64x256xf32>, vector<8x256xf32> -> vector<8x256xf32>
    %94 = vector.broadcast %5 : vector<1x256xf32> to vector<8x256xf32>
    %95 = arith.addf %93, %94 : vector<8x256xf32>
    %cst_32 = arith.constant dense<0xFF800000> : vector<8xf32>
    %96 = vector.multi_reduction <maximumf>, %95, %cst_32 [1] : vector<8x256xf32> to vector<8xf32>
    %97 = vector.shape_cast %96 : vector<8xf32> to vector<8x1xf32>
    %98 = vector.broadcast %97 : vector<8x1xf32> to vector<8x256xf32>
    %99 = arith.subf %95, %98 : vector<8x256xf32>
    %100 = math.exp %99 : vector<8x256xf32>
    %cst_33 = arith.constant dense<0.000000e+00> : vector<8xf32>
    %101 = vector.multi_reduction <add>, %100, %cst_33 [1] : vector<8x256xf32> to vector<8xf32>
    %102 = vector.shape_cast %101 : vector<8xf32> to vector<8x1xf32>
    %103 = math.log %102 : vector<8x1xf32>
    %104 = arith.addf %97, %103 : vector<8x1xf32>
    %105 = arith.index_cast %c1_i32 : i32 to index
    %c0_34 = arith.constant 0 : index
    %c0_35 = arith.constant 0 : index
    %106 = vector.load %arg2[%105, %c0_34, %c0_35] : memref<8x8x1xi32, #tpu.memory_space<vmem>>, vector<1x8x1xi32>
    %107 = vector.shape_cast %106 : vector<1x8x1xi32> to vector<8x1xi32>
    %108 = tpu.iota {dimensions = array<i32: 1>} : vector<8x256xi32>
    %109 = vector.broadcast %107 : vector<8x1xi32> to vector<8x256xi32>
    %110 = arith.cmpi eq, %108, %109 : vector<8x256xi32>
    %cst_36 = arith.constant 0.000000e+00 : f32
    %111 = vector.broadcast %cst_36 : f32 to vector<8x256xf32>
    %112 = arith.select %110, %95, %111 : vector<8x256xi1>, vector<8x256xf32>
    %cst_37 = arith.constant dense<0.000000e+00> : vector<8xf32>
    %113 = vector.multi_reduction <add>, %112, %cst_37 [1] : vector<8x256xf32> to vector<8xf32>
    %114 = vector.shape_cast %113 : vector<8xf32> to vector<8x1xf32>
    %115 = arith.subf %114, %104 : vector<8x1xf32>
    %116 = arith.addf %62, %115 : vector<8x1xf32>
    %c2_i32 = arith.constant 2 : i32
    %117 = arith.index_cast %c2_i32 : i32 to index
    %c0_38 = arith.constant 0 : index
    %c0_39 = arith.constant 0 : index
    %118 = vector.load %arg1[%117, %c0_38, %c0_39] : memref<8x8x256xf32, #tpu.memory_space<vmem>>, vector<1x8x256xf32>
    %119 = vector.shape_cast %118 : vector<1x8x256xf32> to vector<8x256xf32>
    %cst_40 = arith.constant dense<0.000000e+00> : vector<8x256xf32>
    %120 = tpu.matmul %92, %3, %cst_40 {dimension_numbers = #tpu.dot_dimension_numbers<[1], [0], [0], [1], [0, 0, 1, 1], [], []>} : vector<8x64xf32>, vector<64x256xf32>, vector<8x256xf32> -> vector<8x256xf32>
    %121 = arith.addf %119, %120 : vector<8x256xf32>
    %122 = vector.extract_strided_slice %121 {offsets = [0, 0], sizes = [8, 64], strides = [1, 1]} : vector<8x256xf32> to vector<8x64xf32>
    %123 = arith.negf %122 : vector<8x64xf32>
    %124 = math.exp %123 : vector<8x64xf32>
    %cst_41 = arith.constant 1.000000e+00 : f32
    %125 = vector.broadcast %cst_41 : f32 to vector<8x64xf32>
    %126 = arith.addf %125, %124 : vector<8x64xf32>
    %127 = arith.divf %125, %126 : vector<8x64xf32>
    %128 = vector.extract_strided_slice %121 {offsets = [0, 64], sizes = [8, 64], strides = [1, 1]} : vector<8x256xf32> to vector<8x64xf32>
    %129 = arith.negf %128 : vector<8x64xf32>
    %130 = math.exp %129 : vector<8x64xf32>
    %cst_42 = arith.constant 1.000000e+00 : f32
    %131 = vector.broadcast %cst_42 : f32 to vector<8x64xf32>
    %132 = arith.addf %131, %130 : vector<8x64xf32>
    %133 = arith.divf %131, %132 : vector<8x64xf32>
    %134 = vector.extract_strided_slice %121 {offsets = [0, 128], sizes = [8, 64], strides = [1, 1]} : vector<8x256xf32> to vector<8x64xf32>
    %135 = math.tanh %134 : vector<8x64xf32>
    %136 = vector.extract_strided_slice %121 {offsets = [0, 192], sizes = [8, 64], strides = [1, 1]} : vector<8x256xf32> to vector<8x64xf32>
    %137 = arith.negf %136 : vector<8x64xf32>
    %138 = math.exp %137 : vector<8x64xf32>
    %cst_43 = arith.constant 1.000000e+00 : f32
    %139 = vector.broadcast %cst_43 : f32 to vector<8x64xf32>
    %140 = arith.addf %139, %138 : vector<8x64xf32>
    %141 = arith.divf %139, %140 : vector<8x64xf32>
    %142 = arith.mulf %133, %90 : vector<8x64xf32>
    %143 = arith.mulf %127, %135 : vector<8x64xf32>
    %144 = arith.addf %142, %143 : vector<8x64xf32>
    %145 = math.tanh %144 : vector<8x64xf32>
    %146 = arith.mulf %141, %145 : vector<8x64xf32>
    %cst_44 = arith.constant dense<0.000000e+00> : vector<8x256xf32>
    %147 = tpu.matmul %146, %4, %cst_44 {dimension_numbers = #tpu.dot_dimension_numbers<[1], [0], [0], [1], [0, 0, 1, 1], [], []>} : vector<8x64xf32>, vector<64x256xf32>, vector<8x256xf32> -> vector<8x256xf32>
    %148 = vector.broadcast %5 : vector<1x256xf32> to vector<8x256xf32>
    %149 = arith.addf %147, %148 : vector<8x256xf32>
    %cst_45 = arith.constant dense<0xFF800000> : vector<8xf32>
    %150 = vector.multi_reduction <maximumf>, %149, %cst_45 [1] : vector<8x256xf32> to vector<8xf32>
    %151 = vector.shape_cast %150 : vector<8xf32> to vector<8x1xf32>
    %152 = vector.broadcast %151 : vector<8x1xf32> to vector<8x256xf32>
    %153 = arith.subf %149, %152 : vector<8x256xf32>
    %154 = math.exp %153 : vector<8x256xf32>
    %cst_46 = arith.constant dense<0.000000e+00> : vector<8xf32>
    %155 = vector.multi_reduction <add>, %154, %cst_46 [1] : vector<8x256xf32> to vector<8xf32>
    %156 = vector.shape_cast %155 : vector<8xf32> to vector<8x1xf32>
    %157 = math.log %156 : vector<8x1xf32>
    %158 = arith.addf %151, %157 : vector<8x1xf32>
    %159 = arith.index_cast %c2_i32 : i32 to index
    %c0_47 = arith.constant 0 : index
    %c0_48 = arith.constant 0 : index
    %160 = vector.load %arg2[%159, %c0_47, %c0_48] : memref<8x8x1xi32, #tpu.memory_space<vmem>>, vector<1x8x1xi32>
    %161 = vector.shape_cast %160 : vector<1x8x1xi32> to vector<8x1xi32>
    %162 = tpu.iota {dimensions = array<i32: 1>} : vector<8x256xi32>
    %163 = vector.broadcast %161 : vector<8x1xi32> to vector<8x256xi32>
    %164 = arith.cmpi eq, %162, %163 : vector<8x256xi32>
    %cst_49 = arith.constant 0.000000e+00 : f32
    %165 = vector.broadcast %cst_49 : f32 to vector<8x256xf32>
    %166 = arith.select %164, %149, %165 : vector<8x256xi1>, vector<8x256xf32>
    %cst_50 = arith.constant dense<0.000000e+00> : vector<8xf32>
    %167 = vector.multi_reduction <add>, %166, %cst_50 [1] : vector<8x256xf32> to vector<8xf32>
    %168 = vector.shape_cast %167 : vector<8xf32> to vector<8x1xf32>
    %169 = arith.subf %168, %158 : vector<8x1xf32>
    %170 = arith.addf %116, %169 : vector<8x1xf32>
    %c3_i32 = arith.constant 3 : i32
    %171 = arith.index_cast %c3_i32 : i32 to index
    %c0_51 = arith.constant 0 : index
    %c0_52 = arith.constant 0 : index
    %172 = vector.load %arg1[%171, %c0_51, %c0_52] : memref<8x8x256xf32, #tpu.memory_space<vmem>>, vector<1x8x256xf32>
    %173 = vector.shape_cast %172 : vector<1x8x256xf32> to vector<8x256xf32>
    %cst_53 = arith.constant dense<0.000000e+00> : vector<8x256xf32>
    %174 = tpu.matmul %146, %3, %cst_53 {dimension_numbers = #tpu.dot_dimension_numbers<[1], [0], [0], [1], [0, 0, 1, 1], [], []>} : vector<8x64xf32>, vector<64x256xf32>, vector<8x256xf32> -> vector<8x256xf32>
    %175 = arith.addf %173, %174 : vector<8x256xf32>
    %176 = vector.extract_strided_slice %175 {offsets = [0, 0], sizes = [8, 64], strides = [1, 1]} : vector<8x256xf32> to vector<8x64xf32>
    %177 = arith.negf %176 : vector<8x64xf32>
    %178 = math.exp %177 : vector<8x64xf32>
    %cst_54 = arith.constant 1.000000e+00 : f32
    %179 = vector.broadcast %cst_54 : f32 to vector<8x64xf32>
    %180 = arith.addf %179, %178 : vector<8x64xf32>
    %181 = arith.divf %179, %180 : vector<8x64xf32>
    %182 = vector.extract_strided_slice %175 {offsets = [0, 64], sizes = [8, 64], strides = [1, 1]} : vector<8x256xf32> to vector<8x64xf32>
    %183 = arith.negf %182 : vector<8x64xf32>
    %184 = math.exp %183 : vector<8x64xf32>
    %cst_55 = arith.constant 1.000000e+00 : f32
    %185 = vector.broadcast %cst_55 : f32 to vector<8x64xf32>
    %186 = arith.addf %185, %184 : vector<8x64xf32>
    %187 = arith.divf %185, %186 : vector<8x64xf32>
    %188 = vector.extract_strided_slice %175 {offsets = [0, 128], sizes = [8, 64], strides = [1, 1]} : vector<8x256xf32> to vector<8x64xf32>
    %189 = math.tanh %188 : vector<8x64xf32>
    %190 = vector.extract_strided_slice %175 {offsets = [0, 192], sizes = [8, 64], strides = [1, 1]} : vector<8x256xf32> to vector<8x64xf32>
    %191 = arith.negf %190 : vector<8x64xf32>
    %192 = math.exp %191 : vector<8x64xf32>
    %cst_56 = arith.constant 1.000000e+00 : f32
    %193 = vector.broadcast %cst_56 : f32 to vector<8x64xf32>
    %194 = arith.addf %193, %192 : vector<8x64xf32>
    %195 = arith.divf %193, %194 : vector<8x64xf32>
    %196 = arith.mulf %187, %144 : vector<8x64xf32>
    %197 = arith.mulf %181, %189 : vector<8x64xf32>
    %198 = arith.addf %196, %197 : vector<8x64xf32>
    %199 = math.tanh %198 : vector<8x64xf32>
    %200 = arith.mulf %195, %199 : vector<8x64xf32>
    %cst_57 = arith.constant dense<0.000000e+00> : vector<8x256xf32>
    %201 = tpu.matmul %200, %4, %cst_57 {dimension_numbers = #tpu.dot_dimension_numbers<[1], [0], [0], [1], [0, 0, 1, 1], [], []>} : vector<8x64xf32>, vector<64x256xf32>, vector<8x256xf32> -> vector<8x256xf32>
    %202 = vector.broadcast %5 : vector<1x256xf32> to vector<8x256xf32>
    %203 = arith.addf %201, %202 : vector<8x256xf32>
    %cst_58 = arith.constant dense<0xFF800000> : vector<8xf32>
    %204 = vector.multi_reduction <maximumf>, %203, %cst_58 [1] : vector<8x256xf32> to vector<8xf32>
    %205 = vector.shape_cast %204 : vector<8xf32> to vector<8x1xf32>
    %206 = vector.broadcast %205 : vector<8x1xf32> to vector<8x256xf32>
    %207 = arith.subf %203, %206 : vector<8x256xf32>
    %208 = math.exp %207 : vector<8x256xf32>
    %cst_59 = arith.constant dense<0.000000e+00> : vector<8xf32>
    %209 = vector.multi_reduction <add>, %208, %cst_59 [1] : vector<8x256xf32> to vector<8xf32>
    %210 = vector.shape_cast %209 : vector<8xf32> to vector<8x1xf32>
    %211 = math.log %210 : vector<8x1xf32>
    %212 = arith.addf %205, %211 : vector<8x1xf32>
    %213 = arith.index_cast %c3_i32 : i32 to index
    %c0_60 = arith.constant 0 : index
    %c0_61 = arith.constant 0 : index
    %214 = vector.load %arg2[%213, %c0_60, %c0_61] : memref<8x8x1xi32, #tpu.memory_space<vmem>>, vector<1x8x1xi32>
    %215 = vector.shape_cast %214 : vector<1x8x1xi32> to vector<8x1xi32>
    %216 = tpu.iota {dimensions = array<i32: 1>} : vector<8x256xi32>
    %217 = vector.broadcast %215 : vector<8x1xi32> to vector<8x256xi32>
    %218 = arith.cmpi eq, %216, %217 : vector<8x256xi32>
    %cst_62 = arith.constant 0.000000e+00 : f32
    %219 = vector.broadcast %cst_62 : f32 to vector<8x256xf32>
    %220 = arith.select %218, %203, %219 : vector<8x256xi1>, vector<8x256xf32>
    %cst_63 = arith.constant dense<0.000000e+00> : vector<8xf32>
    %221 = vector.multi_reduction <add>, %220, %cst_63 [1] : vector<8x256xf32> to vector<8xf32>
    %222 = vector.shape_cast %221 : vector<8xf32> to vector<8x1xf32>
    %223 = arith.subf %222, %212 : vector<8x1xf32>
    %224 = arith.addf %170, %223 : vector<8x1xf32>
    %c4_i32 = arith.constant 4 : i32
    %225 = arith.index_cast %c4_i32 : i32 to index
    %c0_64 = arith.constant 0 : index
    %c0_65 = arith.constant 0 : index
    %226 = vector.load %arg1[%225, %c0_64, %c0_65] : memref<8x8x256xf32, #tpu.memory_space<vmem>>, vector<1x8x256xf32>
    %227 = vector.shape_cast %226 : vector<1x8x256xf32> to vector<8x256xf32>
    %cst_66 = arith.constant dense<0.000000e+00> : vector<8x256xf32>
    %228 = tpu.matmul %200, %3, %cst_66 {dimension_numbers = #tpu.dot_dimension_numbers<[1], [0], [0], [1], [0, 0, 1, 1], [], []>} : vector<8x64xf32>, vector<64x256xf32>, vector<8x256xf32> -> vector<8x256xf32>
    %229 = arith.addf %227, %228 : vector<8x256xf32>
    %230 = vector.extract_strided_slice %229 {offsets = [0, 0], sizes = [8, 64], strides = [1, 1]} : vector<8x256xf32> to vector<8x64xf32>
    %231 = arith.negf %230 : vector<8x64xf32>
    %232 = math.exp %231 : vector<8x64xf32>
    %cst_67 = arith.constant 1.000000e+00 : f32
    %233 = vector.broadcast %cst_67 : f32 to vector<8x64xf32>
    %234 = arith.addf %233, %232 : vector<8x64xf32>
    %235 = arith.divf %233, %234 : vector<8x64xf32>
    %236 = vector.extract_strided_slice %229 {offsets = [0, 64], sizes = [8, 64], strides = [1, 1]} : vector<8x256xf32> to vector<8x64xf32>
    %237 = arith.negf %236 : vector<8x64xf32>
    %238 = math.exp %237 : vector<8x64xf32>
    %cst_68 = arith.constant 1.000000e+00 : f32
    %239 = vector.broadcast %cst_68 : f32 to vector<8x64xf32>
    %240 = arith.addf %239, %238 : vector<8x64xf32>
    %241 = arith.divf %239, %240 : vector<8x64xf32>
    %242 = vector.extract_strided_slice %229 {offsets = [0, 128], sizes = [8, 64], strides = [1, 1]} : vector<8x256xf32> to vector<8x64xf32>
    %243 = math.tanh %242 : vector<8x64xf32>
    %244 = vector.extract_strided_slice %229 {offsets = [0, 192], sizes = [8, 64], strides = [1, 1]} : vector<8x256xf32> to vector<8x64xf32>
    %245 = arith.negf %244 : vector<8x64xf32>
    %246 = math.exp %245 : vector<8x64xf32>
    %cst_69 = arith.constant 1.000000e+00 : f32
    %247 = vector.broadcast %cst_69 : f32 to vector<8x64xf32>
    %248 = arith.addf %247, %246 : vector<8x64xf32>
    %249 = arith.divf %247, %248 : vector<8x64xf32>
    %250 = arith.mulf %241, %198 : vector<8x64xf32>
    %251 = arith.mulf %235, %243 : vector<8x64xf32>
    %252 = arith.addf %250, %251 : vector<8x64xf32>
    %253 = math.tanh %252 : vector<8x64xf32>
    %254 = arith.mulf %249, %253 : vector<8x64xf32>
    %cst_70 = arith.constant dense<0.000000e+00> : vector<8x256xf32>
    %255 = tpu.matmul %254, %4, %cst_70 {dimension_numbers = #tpu.dot_dimension_numbers<[1], [0], [0], [1], [0, 0, 1, 1], [], []>} : vector<8x64xf32>, vector<64x256xf32>, vector<8x256xf32> -> vector<8x256xf32>
    %256 = vector.broadcast %5 : vector<1x256xf32> to vector<8x256xf32>
    %257 = arith.addf %255, %256 : vector<8x256xf32>
    %cst_71 = arith.constant dense<0xFF800000> : vector<8xf32>
    %258 = vector.multi_reduction <maximumf>, %257, %cst_71 [1] : vector<8x256xf32> to vector<8xf32>
    %259 = vector.shape_cast %258 : vector<8xf32> to vector<8x1xf32>
    %260 = vector.broadcast %259 : vector<8x1xf32> to vector<8x256xf32>
    %261 = arith.subf %257, %260 : vector<8x256xf32>
    %262 = math.exp %261 : vector<8x256xf32>
    %cst_72 = arith.constant dense<0.000000e+00> : vector<8xf32>
    %263 = vector.multi_reduction <add>, %262, %cst_72 [1] : vector<8x256xf32> to vector<8xf32>
    %264 = vector.shape_cast %263 : vector<8xf32> to vector<8x1xf32>
    %265 = math.log %264 : vector<8x1xf32>
    %266 = arith.addf %259, %265 : vector<8x1xf32>
    %267 = arith.index_cast %c4_i32 : i32 to index
    %c0_73 = arith.constant 0 : index
    %c0_74 = arith.constant 0 : index
    %268 = vector.load %arg2[%267, %c0_73, %c0_74] : memref<8x8x1xi32, #tpu.memory_space<vmem>>, vector<1x8x1xi32>
    %269 = vector.shape_cast %268 : vector<1x8x1xi32> to vector<8x1xi32>
    %270 = tpu.iota {dimensions = array<i32: 1>} : vector<8x256xi32>
    %271 = vector.broadcast %269 : vector<8x1xi32> to vector<8x256xi32>
    %272 = arith.cmpi eq, %270, %271 : vector<8x256xi32>
    %cst_75 = arith.constant 0.000000e+00 : f32
    %273 = vector.broadcast %cst_75 : f32 to vector<8x256xf32>
    %274 = arith.select %272, %257, %273 : vector<8x256xi1>, vector<8x256xf32>
    %cst_76 = arith.constant dense<0.000000e+00> : vector<8xf32>
    %275 = vector.multi_reduction <add>, %274, %cst_76 [1] : vector<8x256xf32> to vector<8xf32>
    %276 = vector.shape_cast %275 : vector<8xf32> to vector<8x1xf32>
    %277 = arith.subf %276, %266 : vector<8x1xf32>
    %278 = arith.addf %224, %277 : vector<8x1xf32>
    %c5_i32 = arith.constant 5 : i32
    %279 = arith.index_cast %c5_i32 : i32 to index
    %c0_77 = arith.constant 0 : index
    %c0_78 = arith.constant 0 : index
    %280 = vector.load %arg1[%279, %c0_77, %c0_78] : memref<8x8x256xf32, #tpu.memory_space<vmem>>, vector<1x8x256xf32>
    %281 = vector.shape_cast %280 : vector<1x8x256xf32> to vector<8x256xf32>
    %cst_79 = arith.constant dense<0.000000e+00> : vector<8x256xf32>
    %282 = tpu.matmul %254, %3, %cst_79 {dimension_numbers = #tpu.dot_dimension_numbers<[1], [0], [0], [1], [0, 0, 1, 1], [], []>} : vector<8x64xf32>, vector<64x256xf32>, vector<8x256xf32> -> vector<8x256xf32>
    %283 = arith.addf %281, %282 : vector<8x256xf32>
    %284 = vector.extract_strided_slice %283 {offsets = [0, 0], sizes = [8, 64], strides = [1, 1]} : vector<8x256xf32> to vector<8x64xf32>
    %285 = arith.negf %284 : vector<8x64xf32>
    %286 = math.exp %285 : vector<8x64xf32>
    %cst_80 = arith.constant 1.000000e+00 : f32
    %287 = vector.broadcast %cst_80 : f32 to vector<8x64xf32>
    %288 = arith.addf %287, %286 : vector<8x64xf32>
    %289 = arith.divf %287, %288 : vector<8x64xf32>
    %290 = vector.extract_strided_slice %283 {offsets = [0, 64], sizes = [8, 64], strides = [1, 1]} : vector<8x256xf32> to vector<8x64xf32>
    %291 = arith.negf %290 : vector<8x64xf32>
    %292 = math.exp %291 : vector<8x64xf32>
    %cst_81 = arith.constant 1.000000e+00 : f32
    %293 = vector.broadcast %cst_81 : f32 to vector<8x64xf32>
    %294 = arith.addf %293, %292 : vector<8x64xf32>
    %295 = arith.divf %293, %294 : vector<8x64xf32>
    %296 = vector.extract_strided_slice %283 {offsets = [0, 128], sizes = [8, 64], strides = [1, 1]} : vector<8x256xf32> to vector<8x64xf32>
    %297 = math.tanh %296 : vector<8x64xf32>
    %298 = vector.extract_strided_slice %283 {offsets = [0, 192], sizes = [8, 64], strides = [1, 1]} : vector<8x256xf32> to vector<8x64xf32>
    %299 = arith.negf %298 : vector<8x64xf32>
    %300 = math.exp %299 : vector<8x64xf32>
    %cst_82 = arith.constant 1.000000e+00 : f32
    %301 = vector.broadcast %cst_82 : f32 to vector<8x64xf32>
    %302 = arith.addf %301, %300 : vector<8x64xf32>
    %303 = arith.divf %301, %302 : vector<8x64xf32>
    %304 = arith.mulf %295, %252 : vector<8x64xf32>
    %305 = arith.mulf %289, %297 : vector<8x64xf32>
    %306 = arith.addf %304, %305 : vector<8x64xf32>
    %307 = math.tanh %306 : vector<8x64xf32>
    %308 = arith.mulf %303, %307 : vector<8x64xf32>
    %cst_83 = arith.constant dense<0.000000e+00> : vector<8x256xf32>
    %309 = tpu.matmul %308, %4, %cst_83 {dimension_numbers = #tpu.dot_dimension_numbers<[1], [0], [0], [1], [0, 0, 1, 1], [], []>} : vector<8x64xf32>, vector<64x256xf32>, vector<8x256xf32> -> vector<8x256xf32>
    %310 = vector.broadcast %5 : vector<1x256xf32> to vector<8x256xf32>
    %311 = arith.addf %309, %310 : vector<8x256xf32>
    %cst_84 = arith.constant dense<0xFF800000> : vector<8xf32>
    %312 = vector.multi_reduction <maximumf>, %311, %cst_84 [1] : vector<8x256xf32> to vector<8xf32>
    %313 = vector.shape_cast %312 : vector<8xf32> to vector<8x1xf32>
    %314 = vector.broadcast %313 : vector<8x1xf32> to vector<8x256xf32>
    %315 = arith.subf %311, %314 : vector<8x256xf32>
    %316 = math.exp %315 : vector<8x256xf32>
    %cst_85 = arith.constant dense<0.000000e+00> : vector<8xf32>
    %317 = vector.multi_reduction <add>, %316, %cst_85 [1] : vector<8x256xf32> to vector<8xf32>
    %318 = vector.shape_cast %317 : vector<8xf32> to vector<8x1xf32>
    %319 = math.log %318 : vector<8x1xf32>
    %320 = arith.addf %313, %319 : vector<8x1xf32>
    %321 = arith.index_cast %c5_i32 : i32 to index
    %c0_86 = arith.constant 0 : index
    %c0_87 = arith.constant 0 : index
    %322 = vector.load %arg2[%321, %c0_86, %c0_87] : memref<8x8x1xi32, #tpu.memory_space<vmem>>, vector<1x8x1xi32>
    %323 = vector.shape_cast %322 : vector<1x8x1xi32> to vector<8x1xi32>
    %324 = tpu.iota {dimensions = array<i32: 1>} : vector<8x256xi32>
    %325 = vector.broadcast %323 : vector<8x1xi32> to vector<8x256xi32>
    %326 = arith.cmpi eq, %324, %325 : vector<8x256xi32>
    %cst_88 = arith.constant 0.000000e+00 : f32
    %327 = vector.broadcast %cst_88 : f32 to vector<8x256xf32>
    %328 = arith.select %326, %311, %327 : vector<8x256xi1>, vector<8x256xf32>
    %cst_89 = arith.constant dense<0.000000e+00> : vector<8xf32>
    %329 = vector.multi_reduction <add>, %328, %cst_89 [1] : vector<8x256xf32> to vector<8xf32>
    %330 = vector.shape_cast %329 : vector<8xf32> to vector<8x1xf32>
    %331 = arith.subf %330, %320 : vector<8x1xf32>
    %332 = arith.addf %278, %331 : vector<8x1xf32>
    %c6_i32 = arith.constant 6 : i32
    %333 = arith.index_cast %c6_i32 : i32 to index
    %c0_90 = arith.constant 0 : index
    %c0_91 = arith.constant 0 : index
    %334 = vector.load %arg1[%333, %c0_90, %c0_91] : memref<8x8x256xf32, #tpu.memory_space<vmem>>, vector<1x8x256xf32>
    %335 = vector.shape_cast %334 : vector<1x8x256xf32> to vector<8x256xf32>
    %cst_92 = arith.constant dense<0.000000e+00> : vector<8x256xf32>
    %336 = tpu.matmul %308, %3, %cst_92 {dimension_numbers = #tpu.dot_dimension_numbers<[1], [0], [0], [1], [0, 0, 1, 1], [], []>} : vector<8x64xf32>, vector<64x256xf32>, vector<8x256xf32> -> vector<8x256xf32>
    %337 = arith.addf %335, %336 : vector<8x256xf32>
    %338 = vector.extract_strided_slice %337 {offsets = [0, 0], sizes = [8, 64], strides = [1, 1]} : vector<8x256xf32> to vector<8x64xf32>
    %339 = arith.negf %338 : vector<8x64xf32>
    %340 = math.exp %339 : vector<8x64xf32>
    %cst_93 = arith.constant 1.000000e+00 : f32
    %341 = vector.broadcast %cst_93 : f32 to vector<8x64xf32>
    %342 = arith.addf %341, %340 : vector<8x64xf32>
    %343 = arith.divf %341, %342 : vector<8x64xf32>
    %344 = vector.extract_strided_slice %337 {offsets = [0, 64], sizes = [8, 64], strides = [1, 1]} : vector<8x256xf32> to vector<8x64xf32>
    %345 = arith.negf %344 : vector<8x64xf32>
    %346 = math.exp %345 : vector<8x64xf32>
    %cst_94 = arith.constant 1.000000e+00 : f32
    %347 = vector.broadcast %cst_94 : f32 to vector<8x64xf32>
    %348 = arith.addf %347, %346 : vector<8x64xf32>
    %349 = arith.divf %347, %348 : vector<8x64xf32>
    %350 = vector.extract_strided_slice %337 {offsets = [0, 128], sizes = [8, 64], strides = [1, 1]} : vector<8x256xf32> to vector<8x64xf32>
    %351 = math.tanh %350 : vector<8x64xf32>
    %352 = vector.extract_strided_slice %337 {offsets = [0, 192], sizes = [8, 64], strides = [1, 1]} : vector<8x256xf32> to vector<8x64xf32>
    %353 = arith.negf %352 : vector<8x64xf32>
    %354 = math.exp %353 : vector<8x64xf32>
    %cst_95 = arith.constant 1.000000e+00 : f32
    %355 = vector.broadcast %cst_95 : f32 to vector<8x64xf32>
    %356 = arith.addf %355, %354 : vector<8x64xf32>
    %357 = arith.divf %355, %356 : vector<8x64xf32>
    %358 = arith.mulf %349, %306 : vector<8x64xf32>
    %359 = arith.mulf %343, %351 : vector<8x64xf32>
    %360 = arith.addf %358, %359 : vector<8x64xf32>
    %361 = math.tanh %360 : vector<8x64xf32>
    %362 = arith.mulf %357, %361 : vector<8x64xf32>
    %cst_96 = arith.constant dense<0.000000e+00> : vector<8x256xf32>
    %363 = tpu.matmul %362, %4, %cst_96 {dimension_numbers = #tpu.dot_dimension_numbers<[1], [0], [0], [1], [0, 0, 1, 1], [], []>} : vector<8x64xf32>, vector<64x256xf32>, vector<8x256xf32> -> vector<8x256xf32>
    %364 = vector.broadcast %5 : vector<1x256xf32> to vector<8x256xf32>
    %365 = arith.addf %363, %364 : vector<8x256xf32>
    %cst_97 = arith.constant dense<0xFF800000> : vector<8xf32>
    %366 = vector.multi_reduction <maximumf>, %365, %cst_97 [1] : vector<8x256xf32> to vector<8xf32>
    %367 = vector.shape_cast %366 : vector<8xf32> to vector<8x1xf32>
    %368 = vector.broadcast %367 : vector<8x1xf32> to vector<8x256xf32>
    %369 = arith.subf %365, %368 : vector<8x256xf32>
    %370 = math.exp %369 : vector<8x256xf32>
    %cst_98 = arith.constant dense<0.000000e+00> : vector<8xf32>
    %371 = vector.multi_reduction <add>, %370, %cst_98 [1] : vector<8x256xf32> to vector<8xf32>
    %372 = vector.shape_cast %371 : vector<8xf32> to vector<8x1xf32>
    %373 = math.log %372 : vector<8x1xf32>
    %374 = arith.addf %367, %373 : vector<8x1xf32>
    %375 = arith.index_cast %c6_i32 : i32 to index
    %c0_99 = arith.constant 0 : index
    %c0_100 = arith.constant 0 : index
    %376 = vector.load %arg2[%375, %c0_99, %c0_100] : memref<8x8x1xi32, #tpu.memory_space<vmem>>, vector<1x8x1xi32>
    %377 = vector.shape_cast %376 : vector<1x8x1xi32> to vector<8x1xi32>
    %378 = tpu.iota {dimensions = array<i32: 1>} : vector<8x256xi32>
    %379 = vector.broadcast %377 : vector<8x1xi32> to vector<8x256xi32>
    %380 = arith.cmpi eq, %378, %379 : vector<8x256xi32>
    %cst_101 = arith.constant 0.000000e+00 : f32
    %381 = vector.broadcast %cst_101 : f32 to vector<8x256xf32>
    %382 = arith.select %380, %365, %381 : vector<8x256xi1>, vector<8x256xf32>
    %cst_102 = arith.constant dense<0.000000e+00> : vector<8xf32>
    %383 = vector.multi_reduction <add>, %382, %cst_102 [1] : vector<8x256xf32> to vector<8xf32>
    %384 = vector.shape_cast %383 : vector<8xf32> to vector<8x1xf32>
    %385 = arith.subf %384, %374 : vector<8x1xf32>
    %386 = arith.addf %332, %385 : vector<8x1xf32>
    %c7_i32 = arith.constant 7 : i32
    %387 = arith.index_cast %c7_i32 : i32 to index
    %c0_103 = arith.constant 0 : index
    %c0_104 = arith.constant 0 : index
    %388 = vector.load %arg1[%387, %c0_103, %c0_104] : memref<8x8x256xf32, #tpu.memory_space<vmem>>, vector<1x8x256xf32>
    %389 = vector.shape_cast %388 : vector<1x8x256xf32> to vector<8x256xf32>
    %cst_105 = arith.constant dense<0.000000e+00> : vector<8x256xf32>
    %390 = tpu.matmul %362, %3, %cst_105 {dimension_numbers = #tpu.dot_dimension_numbers<[1], [0], [0], [1], [0, 0, 1, 1], [], []>} : vector<8x64xf32>, vector<64x256xf32>, vector<8x256xf32> -> vector<8x256xf32>
    %391 = arith.addf %389, %390 : vector<8x256xf32>
    %392 = vector.extract_strided_slice %391 {offsets = [0, 0], sizes = [8, 64], strides = [1, 1]} : vector<8x256xf32> to vector<8x64xf32>
    %393 = arith.negf %392 : vector<8x64xf32>
    %394 = math.exp %393 : vector<8x64xf32>
    %cst_106 = arith.constant 1.000000e+00 : f32
    %395 = vector.broadcast %cst_106 : f32 to vector<8x64xf32>
    %396 = arith.addf %395, %394 : vector<8x64xf32>
    %397 = arith.divf %395, %396 : vector<8x64xf32>
    %398 = vector.extract_strided_slice %391 {offsets = [0, 64], sizes = [8, 64], strides = [1, 1]} : vector<8x256xf32> to vector<8x64xf32>
    %399 = arith.negf %398 : vector<8x64xf32>
    %400 = math.exp %399 : vector<8x64xf32>
    %cst_107 = arith.constant 1.000000e+00 : f32
    %401 = vector.broadcast %cst_107 : f32 to vector<8x64xf32>
    %402 = arith.addf %401, %400 : vector<8x64xf32>
    %403 = arith.divf %401, %402 : vector<8x64xf32>
    %404 = vector.extract_strided_slice %391 {offsets = [0, 128], sizes = [8, 64], strides = [1, 1]} : vector<8x256xf32> to vector<8x64xf32>
    %405 = math.tanh %404 : vector<8x64xf32>
    %406 = vector.extract_strided_slice %391 {offsets = [0, 192], sizes = [8, 64], strides = [1, 1]} : vector<8x256xf32> to vector<8x64xf32>
    %407 = arith.negf %406 : vector<8x64xf32>
    %408 = math.exp %407 : vector<8x64xf32>
    %cst_108 = arith.constant 1.000000e+00 : f32
    %409 = vector.broadcast %cst_108 : f32 to vector<8x64xf32>
    %410 = arith.addf %409, %408 : vector<8x64xf32>
    %411 = arith.divf %409, %410 : vector<8x64xf32>
    %412 = arith.mulf %403, %360 : vector<8x64xf32>
    %413 = arith.mulf %397, %405 : vector<8x64xf32>
    %414 = arith.addf %412, %413 : vector<8x64xf32>
    %415 = math.tanh %414 : vector<8x64xf32>
    %416 = arith.mulf %411, %415 : vector<8x64xf32>
    %cst_109 = arith.constant dense<0.000000e+00> : vector<8x256xf32>
    %417 = tpu.matmul %416, %4, %cst_109 {dimension_numbers = #tpu.dot_dimension_numbers<[1], [0], [0], [1], [0, 0, 1, 1], [], []>} : vector<8x64xf32>, vector<64x256xf32>, vector<8x256xf32> -> vector<8x256xf32>
    %418 = vector.broadcast %5 : vector<1x256xf32> to vector<8x256xf32>
    %419 = arith.addf %417, %418 : vector<8x256xf32>
    %cst_110 = arith.constant dense<0xFF800000> : vector<8xf32>
    %420 = vector.multi_reduction <maximumf>, %419, %cst_110 [1] : vector<8x256xf32> to vector<8xf32>
    %421 = vector.shape_cast %420 : vector<8xf32> to vector<8x1xf32>
    %422 = vector.broadcast %421 : vector<8x1xf32> to vector<8x256xf32>
    %423 = arith.subf %419, %422 : vector<8x256xf32>
    %424 = math.exp %423 : vector<8x256xf32>
    %cst_111 = arith.constant dense<0.000000e+00> : vector<8xf32>
    %425 = vector.multi_reduction <add>, %424, %cst_111 [1] : vector<8x256xf32> to vector<8xf32>
    %426 = vector.shape_cast %425 : vector<8xf32> to vector<8x1xf32>
    %427 = math.log %426 : vector<8x1xf32>
    %428 = arith.addf %421, %427 : vector<8x1xf32>
    %429 = arith.index_cast %c7_i32 : i32 to index
    %c0_112 = arith.constant 0 : index
    %c0_113 = arith.constant 0 : index
    %430 = vector.load %arg2[%429, %c0_112, %c0_113] : memref<8x8x1xi32, #tpu.memory_space<vmem>>, vector<1x8x1xi32>
    %431 = vector.shape_cast %430 : vector<1x8x1xi32> to vector<8x1xi32>
    %432 = tpu.iota {dimensions = array<i32: 1>} : vector<8x256xi32>
    %433 = vector.broadcast %431 : vector<8x1xi32> to vector<8x256xi32>
    %434 = arith.cmpi eq, %432, %433 : vector<8x256xi32>
    %cst_114 = arith.constant 0.000000e+00 : f32
    %435 = vector.broadcast %cst_114 : f32 to vector<8x256xf32>
    %436 = arith.select %434, %419, %435 : vector<8x256xi1>, vector<8x256xf32>
    %cst_115 = arith.constant dense<0.000000e+00> : vector<8xf32>
    %437 = vector.multi_reduction <add>, %436, %cst_115 [1] : vector<8x256xf32> to vector<8xf32>
    %438 = vector.shape_cast %437 : vector<8xf32> to vector<8x1xf32>
    %439 = arith.subf %438, %428 : vector<8x1xf32>
    %440 = arith.addf %386, %439 : vector<8x1xf32>
    %c8_i32 = arith.constant 8 : i32
    %c0_116 = arith.constant 0 : index
    %c0_117 = arith.constant 0 : index
    %441 = vector.load %arg7[%c0_116, %c0_117] : memref<8x64xf32, #tpu.memory_space<vmem>>, vector<8x64xf32>
    tpu.vector_store %arg7[%c0_116, %c0_117], %416 {strides = array<i32>} : memref<8x64xf32, #tpu.memory_space<vmem>>, vector<8x64xf32>,
    %c0_118 = arith.constant 0 : index
    %c0_119 = arith.constant 0 : index
    %442 = vector.load %arg8[%c0_118, %c0_119] : memref<8x64xf32, #tpu.memory_space<vmem>>, vector<8x64xf32>
    tpu.vector_store %arg8[%c0_118, %c0_119], %414 {strides = array<i32>} : memref<8x64xf32, #tpu.memory_space<vmem>>, vector<8x64xf32>,
    %c0_120 = arith.constant 0 : index
    %c0_121 = arith.constant 0 : index
    %443 = vector.load %arg6[%c0_120, %c0_121] : memref<8x1xf32, #tpu.memory_space<vmem>>, vector<8x1xf32>
    tpu.vector_store %arg6[%c0_120, %c0_121], %440 {strides = array<i32>} : memref<8x1xf32, #tpu.memory_space<vmem>>, vector<8x1xf32>,
    %c1_i32_122 = arith.constant 1 : i32
    %444 = arith.cmpi eq, %arg0, %c1_i32_122 : i32
    %445 = arith.extui %444 : i1 to i32
    %c0_i32_123 = arith.constant 0 : i32
    %446 = arith.cmpi ne, %445, %c0_i32_123 : i32
    scf.if %446 {
      %c0_124 = arith.constant 0 : index
      %c0_125 = arith.constant 0 : index
      %447 = vector.load %arg6[%c0_124, %c0_125] : memref<8x1xf32, #tpu.memory_space<vmem>>, vector<8x1xf32>
      %cst_126 = arith.constant 1.600000e+01 : f32
      %448 = vector.broadcast %cst_126 : f32 to vector<8x1xf32>
      %449 = arith.divf %447, %448 : vector<8x1xf32>
      %c0_127 = arith.constant 0 : index
      %c0_128 = arith.constant 0 : index
      %450 = vector.load %arg6[%c0_127, %c0_128] : memref<8x1xf32, #tpu.memory_space<vmem>>, vector<8x1xf32>
      tpu.vector_store %arg6[%c0_127, %c0_128], %449 {strides = array<i32>} : memref<8x1xf32, #tpu.memory_space<vmem>>, vector<8x1xf32>,
    } else {
    }
    return
  }
  func.func @transform_0(%arg0: i32) -> (i32, i32, i32) {
    %c0_i32 = arith.constant 0 : i32
    %c0_i32_0 = arith.constant 0 : i32
    %c0_i32_1 = arith.constant 0 : i32
    return %arg0, %c0_i32, %c0_i32_0 : i32, i32, i32
  }
  func.func @transform_1(%arg0: i32) -> (i32, i32, i32) {
    %c0_i32 = arith.constant 0 : i32
    %c0_i32_0 = arith.constant 0 : i32
    %c0_i32_1 = arith.constant 0 : i32
    return %arg0, %c0_i32, %c0_i32_0 : i32, i32, i32
  }
  func.func @transform_2(%arg0: i32) -> (i32, i32) {
    %c0_i32 = arith.constant 0 : i32
    %c0_i32_0 = arith.constant 0 : i32
    %c0_i32_1 = arith.constant 0 : i32
    return %c0_i32, %c0_i32_0 : i32, i32
  }
  func.func @transform_3(%arg0: i32) -> (i32, i32) {
    %c0_i32 = arith.constant 0 : i32
    %c0_i32_0 = arith.constant 0 : i32
    %c0_i32_1 = arith.constant 0 : i32
    return %c0_i32, %c0_i32_0 : i32, i32
  }
  func.func @transform_4(%arg0: i32) -> (i32, i32) {
    %c0_i32 = arith.constant 0 : i32
    %c0_i32_0 = arith.constant 0 : i32
    %c0_i32_1 = arith.constant 0 : i32
    return %c0_i32, %c0_i32_0 : i32, i32
  }
  func.func @transform_5(%arg0: i32) -> (i32, i32) {
    %c0_i32 = arith.constant 0 : i32
    %c0_i32_0 = arith.constant 0 : i32
    %c0_i32_1 = arith.constant 0 : i32
    return %c0_i32, %c0_i32_0 : i32, i32
  }
  func.func @transform_6(%arg0: i32) -> (i32, i32) {
    %c0_i32 = arith.constant 0 : i32
    %c0_i32_0 = arith.constant 0 : i32
    %c0_i32_1 = arith.constant 0 : i32
    return %c0_i32, %c0_i32_0 : i32, i32
  }
  func.func @transform_7(%arg0: i32) -> (i32, i32) {
    %c0_i32 = arith.constant 0 : i32
    %c0_i32_0 = arith.constant 0 : i32
    %c0_i32_1 = arith.constant 0 : i32
    return %c0_i32, %c0_i32_0 : i32, i32
  }
}

</mosaic_0001>

<llo_original>
// kernel: tpu_custom_call.1
$region0: #{tpu_custom_call.1}
  #allocation0 [shape = 'u32[]', space=smem, size = 0x4, offset = 0x4, fixed_abs, tag = 'smem constant byte address 0x4 - core index']
  #allocation1 [shape = 'u32[144,128]{1,0:T(1,128)}', space=vmem, size = 0x12000, scoped, tag = 'internal scratch']
  %s0 = inlined_call_operand.hbm [shape: f32[16,8,256], index: 0, kind: input, shape index: {}]
  %s1 = inlined_call_operand.vmem [shape: s32[16,8,1], index: 1, kind: input, shape index: {}]
  %s2 = inlined_call_operand.vmem [shape: f32[64,256], index: 2, kind: input, shape index: {}]
  %s3 = inlined_call_operand.hbm [shape: f32[64,256], index: 3, kind: input, shape index: {}]
  %s4 = inlined_call_operand.vmem [shape: f32[1,256], index: 4, kind: input, shape index: {}]
  %s5 = inlined_call_operand.vmem [shape: f32[8,1], index: 5, kind: output, shape index: {0}]
  %s6 = inlined_call_operand.hbm [shape: f32[8,64], index: 6, kind: output, shape index: {1}]
  %s7 = inlined_call_operand.hbm [shape: f32[8,64], index: 7, kind: output, shape index: {2}]
  %8 = xla_tuple %s5, %s6, %s7
  %s9 = sld [smem:[#allocation0]]
  $region85: #{tpu_custom_call.1} parent=0
    _
  %s11 = ssub.s32 1, %s9
  %s12 = scalar_select 0, %s11, %s9
  $region1: #{tpu_custom_call.1} parent=0
    #allocation2 [shape = 'u8[131072]{0}', space=vmem, size = 0x20000, scoped, tag = 'input window, operand 0']
    #allocation3 [shape = 's32[2]{0}', space=sflag, size = 0x8, scoped, tag = 'scoped memory for tpu_custom_call.1']
    #allocation4 [shape = 's32[2]{0}', space=sflag, size = 0x8, scoped, tag = 'scoped memory for tpu_custom_call.1']
    #allocation5 [shape = 'u8[65536]{0}', space=vmem, size = 0x10000, scoped, tag = 'input window, operand 3, single buffered']
    #allocation6 [shape = 's32[1]{0}', space=sflag, size = 0x4, scoped, tag = 'scoped memory for tpu_custom_call.1']
    #allocation7 [shape = 'u8[4096]{0}', space=vmem, size = 0x1000, scoped, tag = 'output window, operand 1, single buffered']
    #allocation8 [shape = 'u8[4096]{0}', space=vmem, size = 0x1000, scoped, tag = 'output window, operand 2, single buffered']
    #allocation9 [shape = 's32[1]{0}', space=sflag, size = 0x4, scoped, tag = 'scoped memory for tpu_custom_call.1']
    %13 = vsyncpa [#allocation3], 0
    %s14 = scalar_lea.sflag [#allocation3], 1
    %15 = vsyncpa %s14, 0
    %16 = vsyncpa [#allocation6], 0
    %17 = vsyncpa [#allocation4], 0
    %18 = vsyncpa [#allocation9], 0
    loop: start=0, step=1, limit=4
    $region2: #{tpu_custom_call.1} parent=1 // loop_pre_header
      _
    $region3: #{tpu_custom_call.1} parent=1 // loop_header
      %s20 = sphi 0, %s24
      %p21 = scmp.ge.s32.totalorder %s20, 4
      %s30 = sphi 0, %s32
      %s33 = sphi 0, %s30
      %s34 = sphi 0, %s33
      %s50 = sphi 0, %s34
      %s56 = sphi 0, %s58
      %s59 = sphi 0, %s56
      %s60 = sphi 0, %s59
      %s76 = sphi 0, %s60
      %s80 = sphi 0, %s80
      %s82 = sphi 0, %s80
      %s83 = sphi 0, %s82
      %s97 = sphi 0, %s83
      %s101 = sphi 0, %s101
      %s103 = sphi 0, %s101
      %s104 = sphi 0, %s103
      %s118 = sphi 0, %s104
      %s122 = sphi 0, %s122
      %s124 = sphi 0, %s122
      %s125 = sphi 0, %s124
      %s139 = sphi 0, %s125
      %s143 = sphi 0, %s143
      %s145 = sphi 0, %s143
      %s146 = sphi 0, %s145
      %s160 = sphi 0, %s146
      %s164 = sphi 0, %s164
      %s166 = sphi 0, %s164
      %s167 = sphi 0, %s166
      %s181 = sphi 0, %s167
      %s185 = sphi 0, %s185
      %s187 = sphi 0, %s185
      %s188 = sphi 0, %s187
      %s202 = sphi 0, %s188
    $region4: #{tpu_custom_call.1} parent=1 // loop_header_branch
      %23 = sbr.rel (%p21) target = $region8
    $region5: #{tpu_custom_call.1} parent=1 // loop_body
      %s25 = ssub.s32 %s20, 1
      %s26 = ssub.s32 %s20, 2
      %s27 = sadd.s32 %s20, 1
      %s28 = ssub.s32 %s20, %s27
      %p29 = scmp.eq.s32.totalorder %s28, 0
      %s31 = sadd.s32 %s30, 1
      %s32 = scalar_select %p29, %s30, %s31
      %p35 = pneg %p29
      %p36 = scmp.eq.s32.totalorder %s20, 1
      %p37 = por %p35, %p36
      %p38 = scmp.ne.s32.totalorder %s30, %s33
      %p39 = scmp.eq.s32.totalorder %s20, 0
      %p40 = por %p38, %p39
      %p41 = scmp.ne.s32.totalorder %s30, %s33
      %p42 = scmp.eq.s32.totalorder %s25, 1
      %p43 = por %p41, %p42
      %p44 = scmp.ne.s32.totalorder %s33, %s34
      %p45 = scmp.eq.s32.totalorder %s25, 0
      %p46 = por %p44, %p45
      %p47 = scmp.ne.s32.totalorder %s33, %s34
      %p48 = scmp.eq.s32.totalorder %s26, 1
      %p49 = por %p47, %p48
      %p51 = scmp.ne.s32.totalorder %s34, %s50
      %p52 = scmp.eq.s32.totalorder %s26, 0
      %p53 = por %p51, %p52
      %s54 = ssub.s32 %s20, %s27
      %p55 = scmp.eq.s32.totalorder %s54, 0
      %s57 = sadd.s32 %s56, 1
      %s58 = scalar_select %p55, %s56, %s57
      %p61 = pneg %p55
      %p62 = scmp.eq.s32.totalorder %s20, 1
      %p63 = por %p61, %p62
      %p64 = scmp.ne.s32.totalorder %s56, %s59
      %p65 = scmp.eq.s32.totalorder %s20, 0
      %p66 = por %p64, %p65
      %p67 = scmp.ne.s32.totalorder %s56, %s59
      %p68 = scmp.eq.s32.totalorder %s25, 1
      %p69 = por %p67, %p68
      %p70 = scmp.ne.s32.totalorder %s59, %s60
      %p71 = scmp.eq.s32.totalorder %s25, 0
      %p72 = por %p70, %p71
      %p73 = scmp.ne.s32.totalorder %s59, %s60
      %p74 = scmp.eq.s32.totalorder %s26, 1
      %p75 = por %p73, %p74
      %p77 = scmp.ne.s32.totalorder %s60, %s76
      %p78 = scmp.eq.s32.totalorder %s26, 0
      %p79 = por %p77, %p78
      %s81 = sadd.s32 %s80, 1
      %p84 = scmp.eq.s32.totalorder %s20, 1
      %p85 = scmp.ne.s32.totalorder %s80, %s82
      %p86 = scmp.eq.s32.totalorder %s20, 0
      %p87 = por %p85, %p86
      %p88 = scmp.ne.s32.totalorder %s80, %s82
      %p89 = scmp.eq.s32.totalorder %s25, 1
      %p90 = por %p88, %p89
      %p91 = scmp.ne.s32.totalorder %s82, %s83
      %p92 = scmp.eq.s32.totalorder %s25, 0
      %p93 = por %p91, %p92
      %p94 = scmp.ne.s32.totalorder %s82, %s83
      %p95 = scmp.eq.s32.totalorder %s26, 1
      %p96 = por %p94, %p95
      %p98 = scmp.ne.s32.totalorder %s83, %s97
      %p99 = scmp.eq.s32.totalorder %s26, 0
      %p100 = por %p98, %p99
      %s102 = sadd.s32 %s101, 1
      %p105 = scmp.eq.s32.totalorder %s20, 1
      %p106 = scmp.ne.s32.totalorder %s101, %s103
      %p107 = scmp.eq.s32.totalorder %s20, 0
      %p108 = por %p106, %p107
      %p109 = scmp.ne.s32.totalorder %s101, %s103
      %p110 = scmp.eq.s32.totalorder %s25, 1
      %p111 = por %p109, %p110
      %p112 = scmp.ne.s32.totalorder %s103, %s104
      %p113 = scmp.eq.s32.totalorder %s25, 0
      %p114 = por %p112, %p113
      %p115 = scmp.ne.s32.totalorder %s103, %s104
      %p116 = scmp.eq.s32.totalorder %s26, 1
      %p117 = por %p115, %p116
      %p119 = scmp.ne.s32.totalorder %s104, %s118
      %p120 = scmp.eq.s32.totalorder %s26, 0
      %p121 = por %p119, %p120
      %s123 = sadd.s32 %s122, 1
      %p126 = scmp.eq.s32.totalorder %s20, 1
      %p127 = scmp.ne.s32.totalorder %s122, %s124
      %p128 = scmp.eq.s32.totalorder %s20, 0
      %p129 = por %p127, %p128
      %p130 = scmp.ne.s32.totalorder %s122, %s124
      %p131 = scmp.eq.s32.totalorder %s25, 1
      %p132 = por %p130, %p131
      %p133 = scmp.ne.s32.totalorder %s124, %s125
      %p134 = scmp.eq.s32.totalorder %s25, 0
      %p135 = por %p133, %p134
      %p136 = scmp.ne.s32.totalorder %s124, %s125
      %p137 = scmp.eq.s32.totalorder %s26, 1
      %p138 = por %p136, %p137
      %p140 = scmp.ne.s32.totalorder %s125, %s139
      %p141 = scmp.eq.s32.totalorder %s26, 0
      %p142 = por %p140, %p141
      %s144 = sadd.s32 %s143, 1
      %p147 = scmp.eq.s32.totalorder %s20, 1
      %p148 = scmp.ne.s32.totalorder %s143, %s145
      %p149 = scmp.eq.s32.totalorder %s20, 0
      %p150 = por %p148, %p149
      %p151 = scmp.ne.s32.totalorder %s143, %s145
      %p152 = scmp.eq.s32.totalorder %s25, 1
      %p153 = por %p151, %p152
      %p154 = scmp.ne.s32.totalorder %s145, %s146
      %p155 = scmp.eq.s32.totalorder %s25, 0
      %p156 = por %p154, %p155
      %p157 = scmp.ne.s32.totalorder %s145, %s146
      %p158 = scmp.eq.s32.totalorder %s26, 1
      %p159 = por %p157, %p158
      %p161 = scmp.ne.s32.totalorder %s146, %s160
      %p162 = scmp.eq.s32.totalorder %s26, 0
      %p163 = por %p161, %p162
      %s165 = sadd.s32 %s164, 1
      %p168 = scmp.eq.s32.totalorder %s20, 1
      %p169 = scmp.ne.s32.totalorder %s164, %s166
      %p170 = scmp.eq.s32.totalorder %s20, 0
      %p171 = por %p169, %p170
      %p172 = scmp.ne.s32.totalorder %s164, %s166
      %p173 = scmp.eq.s32.totalorder %s25, 1
      %p174 = por %p172, %p173
      %p175 = scmp.ne.s32.totalorder %s166, %s167
      %p176 = scmp.eq.s32.totalorder %s25, 0
      %p177 = por %p175, %p176
      %p178 = scmp.ne.s32.totalorder %s166, %s167
      %p179 = scmp.eq.s32.totalorder %s26, 1
      %p180 = por %p178, %p179
      %p182 = scmp.ne.s32.totalorder %s167, %s181
      %p183 = scmp.eq.s32.totalorder %s26, 0
      %p184 = por %p182, %p183
      %s186 = sadd.s32 %s185, 1
      %p189 = scmp.eq.s32.totalorder %s20, 1
      %p190 = scmp.ne.s32.totalorder %s185, %s187
      %p191 = scmp.eq.s32.totalorder %s20, 0
      %p192 = por %p190, %p191
      %p193 = scmp.ne.s32.totalorder %s185, %s187
      %p194 = scmp.eq.s32.totalorder %s25, 1
      %p195 = por %p193, %p194
      %p196 = scmp.ne.s32.totalorder %s187, %s188
      %p197 = scmp.eq.s32.totalorder %s25, 0
      %p198 = por %p196, %p197
      %p199 = scmp.ne.s32.totalorder %s187, %s188
      %p200 = scmp.eq.s32.totalorder %s26, 1
      %p201 = por %p199, %p200
      %p203 = scmp.ne.s32.totalorder %s188, %s202
      %p204 = scmp.eq.s32.totalorder %s26, 0
      %p205 = por %p203, %p204
      %p206 = scmp.le.s32.totalorder 1, %s20
      %p207 = scmp.lt.s32.totalorder %s20, 3
      %p208 = pnand %p206, %p207
      %p209 = pneg %p208
      // Predicated region
      $region9: #{tpu_custom_call.1} parent=5 // pred_check
        _
      $region10: #{tpu_custom_call.1} parent=5 // pred_check_branch
        %211 = sbr.rel (%p208) target = $region12
      $region11: #{tpu_custom_call.1} parent=5 // pred_region
        %s212 = ssub.s32 %s20, 1
        // Predicated region
        $region13: #{tpu_custom_call.1} parent=11 // pred_check
          %p213 = pneg %p93
        $region14: #{tpu_custom_call.1} parent=11 // pred_check_branch
          %215 = sbr.rel (%p213) target = $region16
        $region15: #{tpu_custom_call.1} parent=11 // pred_region
          _
        $region16: #{tpu_custom_call.1} parent=11 // pred_fallthru
          _
        // Predicated region
        $region17: #{tpu_custom_call.1} parent=11 // pred_check
          %p216 = pneg %p114
        $region18: #{tpu_custom_call.1} parent=11 // pred_check_branch
          %218 = sbr.rel (%p216) target = $region20
        $region19: #{tpu_custom_call.1} parent=11 // pred_region
          %s220 = ssub.s32 2048, 2048
          %221 = vsyncadd [#allocation6], %s220
          %s222 = sshll.u32 [#allocation5], 4
          %s223 = int_to_ptr.vmem [resolvable:$true] %s222
          %228 = dma.hbm_to_vmem [thread:$0]  %s3, 2048, %s223, [#allocation6], 256, 256, 16
        $region20: #{tpu_custom_call.1} parent=11 // pred_fallthru
          _
        // Predicated region
        $region21: #{tpu_custom_call.1} parent=11 // pred_check
          %p229 = pneg %p135
        $region22: #{tpu_custom_call.1} parent=11 // pred_check_branch
          %231 = sbr.rel (%p229) target = $region24
        $region23: #{tpu_custom_call.1} parent=11 // pred_region
          _
        $region24: #{tpu_custom_call.1} parent=11 // pred_fallthru
          _
      $region12: #{tpu_custom_call.1} parent=5 // pred_fallthru
        _
      %p232 = scmp.lt.s32.totalorder %s20, 2
      // Predicated region
      $region25: #{tpu_custom_call.1} parent=5 // pred_check
        %p233 = pneg %p232
      $region26: #{tpu_custom_call.1} parent=5 // pred_check_branch
        %235 = sbr.rel (%p233) target = $region28
      $region27: #{tpu_custom_call.1} parent=5 // pred_region
        // Predicated region
        $region29: #{tpu_custom_call.1} parent=27 // pred_check
          %p236 = pneg %p40
        $region30: #{tpu_custom_call.1} parent=27 // pred_check_branch
          %238 = sbr.rel (%p236) target = $region32
        $region31: #{tpu_custom_call.1} parent=27 // pred_region
          %s239 = sand.u32 %s30, 1
          %s240 = scalar_lea.sflag [#allocation3], %s239
          %s241 = sand.u32 %s30, 1
          %s242 = smul.addr %s241, 128
          %s243 = scalar_lea.vmem [#allocation2], %s242
          %s244 = smul.u32 8, %s20
          %s246 = ssub.s32 2048, 2048
          %247 = vsyncadd %s240, %s246
          %s248 = smul.addr %s244, 2
          %s249 = smul.addr %s248, 128
          %s250 = scalar_lea.hbm %s0, %s249
          %s251 = sshll.u32 %s243, 4
          %s252 = int_to_ptr.vmem [resolvable:$true] %s251
          %257 = dma.hbm_to_vmem [thread:$0]  %s250, 2048, %s252, %s240, 256, 256, 16
        $region32: #{tpu_custom_call.1} parent=27 // pred_fallthru
          _
        // Predicated region
        $region33: #{tpu_custom_call.1} parent=27 // pred_check
          %p258 = pneg %p66
        $region34: #{tpu_custom_call.1} parent=27 // pred_check_branch
          %260 = sbr.rel (%p258) target = $region36
        $region35: #{tpu_custom_call.1} parent=27 // pred_region
          %s261 = smul.u32 8, %s20
          %p262 = scmp.lt.s32.totalorder %s261, 15
          %s263 = scalar_select %p262, %s261, 15
          %s264 = smul.addr %s263, 8
          %s265 = scalar_lea.vmem %s1, %s264
          %s266 = smul.u32 8, %s20
        $region36: #{tpu_custom_call.1} parent=27 // pred_fallthru
          _
      $region28: #{tpu_custom_call.1} parent=5 // pred_fallthru
        _
      %p267 = scmp.le.s32.totalorder 1, %s20
      %p268 = scmp.lt.s32.totalorder %s20, 3
      %p269 = pnand %p267, %p268
      %p270 = pneg %p269
      // Predicated region
      $region37: #{tpu_custom_call.1} parent=5 // pred_check
        _
      $region38: #{tpu_custom_call.1} parent=5 // pred_check_branch
        %272 = sbr.rel (%p269) target = $region40
      $region39: #{tpu_custom_call.1} parent=5 // pred_region
        %s273 = ssub.s32 %s20, 1
        %s274 = sand.u32 %s33, 1
        %s275 = scalar_lea.sflag [#allocation3], %s274
        %s276 = sand.u32 %s33, 1
        %s277 = smul.addr %s276, 128
        %s278 = scalar_lea.vmem [#allocation2], %s277
        // Predicated region
        $region41: #{tpu_custom_call.1} parent=39 // pred_check
          %p279 = pneg %p46
        $region42: #{tpu_custom_call.1} parent=39 // pred_check_branch
          %281 = sbr.rel (%p279) target = $region44
        $region43: #{tpu_custom_call.1} parent=39 // pred_region
          %282 = dma.done %s275, 2048
        $region44: #{tpu_custom_call.1} parent=39 // pred_fallthru
          _
        // Predicated region
        $region45: #{tpu_custom_call.1} parent=39 // pred_check
          %p283 = pneg %p114
        $region46: #{tpu_custom_call.1} parent=39 // pred_check_branch
          %285 = sbr.rel (%p283) target = $region48
        $region47: #{tpu_custom_call.1} parent=39 // pred_region
          %286 = dma.done [#allocation6], 2048
        $region48: #{tpu_custom_call.1} parent=39 // pred_fallthru
          _
        %s287 = sand.u32 %s33, 1
        %s288 = scalar_lea.sflag [#allocation3], %s287
        %s289 = sand.u32 %s33, 1
        %s290 = smul.addr %s289, 128
        %s291 = scalar_lea.vmem [#allocation2], %s290
        %p292 = pneg %p46
        %p293 = pneg %p43
        %s294 = smul.u32 8, %s25
        %p295 = scmp.lt.s32.totalorder %s294, 15
        %s296 = scalar_select %p295, %s294, 15
        %s297 = smul.addr %s296, 8
        %s298 = scalar_lea.vmem %s1, %s297
        %p299 = pneg %p72
        %p300 = pneg %p69
        %p301 = pneg %p93
        %p302 = pneg %p90
        %p303 = pneg %p114
        %p304 = pneg %p111
        %p305 = pneg %p135
        %p306 = pneg %p132
        %p307 = pneg %p156
        %p308 = pneg %p153
        %p309 = pneg %p177
        %p310 = pneg %p174
        %p311 = pneg %p198
        %p312 = pneg %p195
        %s313 = smul.u32 8, %s25
        %s314 = smul.u32 8, %s25
        %p315 = scmp.lt.s32.totalorder %s314, 15
        %s316 = scalar_select %p315, %s314, 15
        %s317 = smul.addr %s316, 8
        %s318 = scalar_lea.vmem %s1, %s317
        %s319 = smul.u32 8, %s25
        %p320 = scmp.eq.s32.totalorder %s25, 0
        // Predicated region
        $region49: #{tpu_custom_call.1} parent=39 // pred_check
          %p321 = pneg %p320
        $region50: #{tpu_custom_call.1} parent=39 // pred_check_branch
          %323 = sbr.rel (%p321) target = $region52
        $region51: #{tpu_custom_call.1} parent=39 // pred_region
          %vm324 = vcmask 7168
          %325 = vst.msk [vmem:[%s5] sm:$0xff] %vm324, 0.0
          %vm326 = vcmask 523264
          %327 = vst.msk [vmem:[#allocation7] sm:$0xff] %vm326, 0.0
          %328 = vst.msk [vmem:[#allocation8] sm:$0xff] %vm326, 0.0
        $region52: #{tpu_custom_call.1} parent=39 // pred_fallthru
          _
        %v329 = vld [vmem:[%s2] sm:$0xff]
        %v330 = vld [vmem:[%s2 + $0x8] sm:$0xff]
        %v331 = vld [vmem:[%s2 + $0x10] sm:$0xff]
        %v332 = vld [vmem:[%s2 + $0x18] sm:$0xff]
        %v333 = vld [vmem:[%s2 + $0x20] sm:$0xff]
        %v334 = vld [vmem:[%s2 + $0x28] sm:$0xff]
        %v335 = vld [vmem:[%s2 + $0x30] sm:$0xff]
        %v336 = vld [vmem:[%s2 + $0x38] sm:$0xff]
        %v337 = vld [vmem:[%s2 + $0x40] sm:$0xff]
        %v338 = vld [vmem:[%s2 + $0x48] sm:$0xff]
        %v339 = vld [vmem:[%s2 + $0x50] sm:$0xff]
        %v340 = vld [vmem:[%s2 + $0x58] sm:$0xff]
        %v341 = vld [vmem:[%s2 + $0x60] sm:$0xff]
        %v342 = vld [vmem:[%s2 + $0x68] sm:$0xff]
        %v343 = vld [vmem:[%s2 + $0x70] sm:$0xff]
        %v344 = vld [vmem:[%s2 + $0x78] sm:$0xff]
        %v345 = vld [vmem:[#allocation5] sm:$0xff]
        %v346 = vld [vmem:[#allocation5 + $0x8] sm:$0xff]
        %v347 = vld [vmem:[#allocation5 + $0x10] sm:$0xff]
        %v348 = vld [vmem:[#allocation5 + $0x18] sm:$0xff]
        %v349 = vld [vmem:[#allocation5 + $0x20] sm:$0xff]
        %v350 = vld [vmem:[#allocation5 + $0x28] sm:$0xff]
        %v351 = vld [vmem:[#allocation5 + $0x30] sm:$0xff]
        %v352 = vld [vmem:[#allocation5 + $0x38] sm:$0xff]
        %v353 = vld [vmem:[#allocation5 + $0x40] sm:$0xff]
        %v354 = vld [vmem:[#allocation5 + $0x48] sm:$0xff]
        %v355 = vld [vmem:[#allocation5 + $0x50] sm:$0xff]
        %v356 = vld [vmem:[#allocation5 + $0x58] sm:$0xff]
        %v357 = vld [vmem:[#allocation5 + $0x60] sm:$0xff]
        %v358 = vld [vmem:[#allocation5 + $0x68] sm:$0xff]
        %v359 = vld [vmem:[#allocation5 + $0x70] sm:$0xff]
        %v360 = vld [vmem:[#allocation5 + $0x78] sm:$0xff]
        %v361 = vld [vmem:[%s4] sm:$0x3]
        %v362 = vld [vmem:[#allocation7] sm:$0xff]
        %v363 = vld [vmem:[#allocation8] sm:$0xff]
        %v364 = vld [vmem:[%s5] sm:$0xff]
        %v365 = vld [vmem:[%s278] sm:$0xff]
        %v366 = vld [vmem:[%s278 + $0x8] sm:$0xff]
        %vm367 = vcmask 523264
        %v369 = vsel %vm367, %v362, 0
        %371 = vmatprep.subr.mxu0 %v330
        %372 = vmatpush1.msra.mxu0 %v329
        %373 = vmatprep.subr.mxu0 %v332
        %374 = vmatpush1.msra.mxu0 %v331
        %375 = vmatprep.subr.mxu0 %v334
        %376 = vmatpush1.msra.mxu0 %v333
        %377 = vmatprep.subr.mxu0 %v336
        %378 = vmatpush1.msra.mxu0 %v335
        %379 = vmatprep.subr.mxu0 %v338
        %380 = vmatpush1.msra.mxu0 %v337
        %381 = vmatprep.subr.mxu0 %v340
        %382 = vmatpush1.msra.mxu0 %v339
        %383 = vmatprep.subr.mxu0 %v342
        %384 = vmatpush1.msra.mxu0 %v341
        %385 = vmatprep.subr.mxu0 %v344
        %386 = vmatpush1.msra.mxu0 %v343
        %387 = vmatprep.subr.mxu0 0.0
        %388 = vmatpush1.msra.mxu0 0.0
        %389 = vmatprep.subr.mxu0 0.0
        %390 = vmatpush1.msra.mxu0 0.0
        %391 = vmatprep.subr.mxu0 0.0
        %392 = vmatpush1.msra.mxu0 0.0
        %393 = vmatprep.subr.mxu0 0.0
        %394 = vmatpush1.msra.mxu0 0.0
        %395 = vmatprep.subr.mxu0 0.0
        %396 = vmatpush1.msra.mxu0 0.0
        %397 = vmatprep.subr.mxu0 0.0
        %398 = vmatpush1.msra.mxu0 0.0
        %399 = vmatprep.subr.mxu0 0.0
        %400 = vmatpush1.msra.mxu0 0.0
        %401 = vmatprep.subr.mxu0 0.0
        %402 = vmatpush1.msra.mxu0 0.0
        %403 = vmatprep.subr.mxu0 0.0
        %404 = vmatpush1.msra.mxu0 0.0
        %405 = vmatprep.subr.mxu0 0.0
        %406 = vmatpush1.msra.mxu0 0.0
        %407 = vmatprep.subr.mxu0 0.0
        %408 = vmatpush1.msra.mxu0 0.0
        %409 = vmatprep.subr.mxu0 0.0
        %410 = vmatpush1.msra.mxu0 0.0
        %411 = vmatprep.subr.mxu0 0.0
        %412 = vmatpush1.msra.mxu0 0.0
        %413 = vmatprep.subr.mxu0 0.0
        %414 = vmatpush1.msra.mxu0 0.0
        %415 = vmatprep.subr.mxu0 0.0
        %416 = vmatpush1.msra.mxu0 0.0
        %417 = vmatprep.subr.mxu0 0.0
        %418 = vmatpush1.msra.mxu0 0.0
        %419 = vmatprep.subr.mxu0 0.0
        %420 = vmatpush1.msra.mxu0 0.0
        %421 = vmatprep.subr.mxu0 0.0
        %422 = vmatpush1.msra.mxu0 0.0
        %423 = vmatprep.subr.mxu0 0.0
        %424 = vmatpush1.msra.mxu0 0.0
        %425 = vmatprep.subr.mxu0 0.0
        %426 = vmatpush1.msra.mxu0 0.0
        %427 = vmatprep.subr.mxu0 0.0
        %428 = vmatpush1.msra.mxu0 0.0
        %429 = vmatprep.subr.mxu0 0.0
        %430 = vmatpush1.msra.mxu0 0.0
        %431 = vmatprep.subr.mxu0 0.0
        %432 = vmatpush1.msra.mxu0 0.0
        %433 = vmatprep.subr.mxu0 0.0
        %434 = vmatpush1.msra.mxu0 0.0
        %435 = vmatprep.mubr.f32.mxu0 0.0
        %436 = vmatmul.mubr.f32.gmra.mrb[0].mxu0 %v369
        %v437 = vpop.f32.mrb[0].mxu0
        %v438 = vadd.f32 0.0, %v437
        %v439 = vpop.f32.mrb[0].mxu0
        %v440 = vadd.f32 0.0, %v439
        %441 = vdwg.mxu0
        %v442 = vadd.f32 %v365, %v438
        %v443 = vadd.f32 %v366, %v440
        %v444 = vxor.u32 %v442, 2147483648
        %v445 = vmul.f32 %v444, 1.442695
        %v446 = vpow.pop %v445
        %v447 = vadd.f32 %v446, 1.0
        %v448 = vrcp.pop %v447
        %v449 = vmul.f32 1.0, %v448
        %v450 = vtanh.pop %v443
        %v451 = vxor.u32 %v443, 2147483648
        %v452 = vmul.f32 %v451, 1.442695
        %v453 = vpow.pop %v452
        %v454 = vadd.f32 %v453, 1.0
        %v455 = vrcp.pop %v454
        %v456 = vmul.f32 1.0, %v455
        %458 = vrot.lane.b32.xlu0 %v363, 64
        %v459 = vpop.permute.xlu0 %458
        %v461 = vmul.f32 %v449, %v459
        %v462 = vmul.f32 %v449, %v450
        %464 = vrot.lane.b32.xlu0 %v462, 64
        %v465 = vpop.permute.xlu0 %464
        %v467 = vadd.f32 %v461, %v465
        %v468 = vtanh.pop %v467
        %v469 = vmul.f32 %v456, %v468
        %v471 = vlaneseq
        %v472 = vshrl.u32 %v471, 7
        %v473 = vsub.s32 0, %v472
        %v474 = vrot.slane %v361, %v473
        %v475 = vlaneseq
        %v476 = vshrl.u32 %v475, 7
        %v477 = vsub.s32 1, %v476
        %v478 = vrot.slane %v361, %v477
        %482 = vrot.lane.b32.xlu0 %v469, 64
        %v483 = vpop.permute.xlu0 %482
        %v484 = vsel %vm367, %v483, 0
        %486 = vmatprep.subr.mxu0 %v346
        %487 = vmatpush1.msra.mxu0 %v345
        %488 = vmatprep.subr.mxu0 %v348
        %489 = vmatpush1.msra.mxu0 %v347
        %490 = vmatprep.subr.mxu0 %v350
        %491 = vmatpush1.msra.mxu0 %v349
        %492 = vmatprep.subr.mxu0 %v352
        %493 = vmatpush1.msra.mxu0 %v351
        %494 = vmatprep.subr.mxu0 %v354
        %495 = vmatpush1.msra.mxu0 %v353
        %496 = vmatprep.subr.mxu0 %v356
        %497 = vmatpush1.msra.mxu0 %v355
        %498 = vmatprep.subr.mxu0 %v358
        %499 = vmatpush1.msra.mxu0 %v357
        %500 = vmatprep.subr.mxu0 %v360
        %501 = vmatpush1.msra.mxu0 %v359
        %502 = vmatprep.subr.mxu0 0.0
        %503 = vmatpush1.msra.mxu0 0.0
        %504 = vmatprep.subr.mxu0 0.0
        %505 = vmatpush1.msra.mxu0 0.0
        %506 = vmatprep.subr.mxu0 0.0
        %507 = vmatpush1.msra.mxu0 0.0
        %508 = vmatprep.subr.mxu0 0.0
        %509 = vmatpush1.msra.mxu0 0.0
        %510 = vmatprep.subr.mxu0 0.0
        %511 = vmatpush1.msra.mxu0 0.0
        %512 = vmatprep.subr.mxu0 0.0
        %513 = vmatpush1.msra.mxu0 0.0
        %514 = vmatprep.subr.mxu0 0.0
        %515 = vmatpush1.msra.mxu0 0.0
        %516 = vmatprep.subr.mxu0 0.0
        %517 = vmatpush1.msra.mxu0 0.0
        %518 = vmatprep.subr.mxu0 0.0
        %519 = vmatpush1.msra.mxu0 0.0
        %520 = vmatprep.subr.mxu0 0.0
        %521 = vmatpush1.msra.mxu0 0.0
        %522 = vmatprep.subr.mxu0 0.0
        %523 = vmatpush1.msra.mxu0 0.0
        %524 = vmatprep.subr.mxu0 0.0
        %525 = vmatpush1.msra.mxu0 0.0
        %526 = vmatprep.subr.mxu0 0.0
        %527 = vmatpush1.msra.mxu0 0.0
        %528 = vmatprep.subr.mxu0 0.0
        %529 = vmatpush1.msra.mxu0 0.0
        %530 = vmatprep.subr.mxu0 0.0
        %531 = vmatpush1.msra.mxu0 0.0
        %532 = vmatprep.subr.mxu0 0.0
        %533 = vmatpush1.msra.mxu0 0.0
        %534 = vmatprep.subr.mxu0 0.0
        %535 = vmatpush1.msra.mxu0 0.0
        %536 = vmatprep.subr.mxu0 0.0
        %537 = vmatpush1.msra.mxu0 0.0
        %538 = vmatprep.subr.mxu0 0.0
        %539 = vmatpush1.msra.mxu0 0.0
        %540 = vmatprep.subr.mxu0 0.0
        %541 = vmatpush1.msra.mxu0 0.0
        %542 = vmatprep.subr.mxu0 0.0
        %543 = vmatpush1.msra.mxu0 0.0
        %544 = vmatprep.subr.mxu0 0.0
        %545 = vmatpush1.msra.mxu0 0.0
        %546 = vmatprep.subr.mxu0 0.0
        %547 = vmatpush1.msra.mxu0 0.0
        %548 = vmatprep.subr.mxu0 0.0
        %549 = vmatpush1.msra.mxu0 0.0
        %550 = vmatprep.mubr.f32.mxu0 0.0
        %551 = vmatmul.mubr.f32.gmra.mrb[0].mxu0 %v484
        %v552 = vpop.f32.mrb[0].mxu0
        %v553 = vadd.f32 %v474, %v552
        %v554 = vpop.f32.mrb[0].mxu0
        %v555 = vadd.f32 %v478, %v554
        %556 = vdwg.mxu0
        %v557 = vmax.f32 %v553, %v555
        %558 = vmax.xlane.f32.xlu0 %v557
        %v559 = vpop.xlane.xlu0 %558
        %v560 = vsub.f32 %v553, %v559
        %v561 = vsub.f32 %v555, %v559
        %v562 = vmul.f32 %v560, 1.442695
        %v563 = vpow.pop %v562
        %v564 = vmul.f32 %v561, 1.442695
        %v565 = vpow.pop %v564
        %v566 = vadd.f32 %v563, %v565
        %567 = vadd.xlane.f32.xlu0 %v566
        %v568 = vpop.xlane.xlu0 %567
        %v569 = vlog2.pop %v568
        %v570 = vmul.f32 %v569, 0.6931472
        %v571 = vadd.f32 %v559, %v570
        %v572 = vld [vmem:[%s318] sm:$0xff]
        %v573 = vlaneseq
        %v574 = vand.u32 %v573, 127
        %v575 = vadd.s32 %v574, 128
        %576 = vset.pattern.permute.xlu0 0
        %577 = vperm.xlu0 %576, %v572
        %v578 = vpop.permute.xlu0 %577
        %vm579 = vcmp.eq.s32.totalorder %v574, %v578
        %vm580 = vcmp.eq.s32.totalorder %v575, %v578
        %v581 = vsel %vm579, %v553, 0.0
        %v582 = vsel %vm580, %v555, 0.0
        %v583 = vadd.f32 %v581, %v582
        %584 = vadd.xlane.f32.xlu0 %v583
        %v585 = vpop.xlane.xlu0 %584
        %v586 = vsub.f32 %v585, %v571
        %v587 = vadd.f32 %v364, %v586
        %s588 = scalar_lea.vmem %s278, 16 [#allocation2]
        %v589 = vld [vmem:[%s588] sm:$0xff]
        %v590 = vld [vmem:[%s588 + $0x8] sm:$0xff]
        %591 = vmatprep.subr.mxu0 %v330
        %592 = vmatpush1.msra.mxu0 %v329
        %593 = vmatprep.subr.mxu0 %v332
        %594 = vmatpush1.msra.mxu0 %v331
        %595 = vmatprep.subr.mxu0 %v334
        %596 = vmatpush1.msra.mxu0 %v333
        %597 = vmatprep.subr.mxu0 %v336
        %598 = vmatpush1.msra.mxu0 %v335
        %599 = vmatprep.subr.mxu0 %v338
        %600 = vmatpush1.msra.mxu0 %v337
        %601 = vmatprep.subr.mxu0 %v340
        %602 = vmatpush1.msra.mxu0 %v339
        %603 = vmatprep.subr.mxu0 %v342
        %604 = vmatpush1.msra.mxu0 %v341
        %605 = vmatprep.subr.mxu0 %v344
        %606 = vmatpush1.msra.mxu0 %v343
        %607 = vmatprep.subr.mxu0 0.0
        %608 = vmatpush1.msra.mxu0 0.0
        %609 = vmatprep.subr.mxu0 0.0
        %610 = vmatpush1.msra.mxu0 0.0
        %611 = vmatprep.subr.mxu0 0.0
        %612 = vmatpush1.msra.mxu0 0.0
        %613 = vmatprep.subr.mxu0 0.0
        %614 = vmatpush1.msra.mxu0 0.0
        %615 = vmatprep.subr.mxu0 0.0
        %616 = vmatpush1.msra.mxu0 0.0
        %617 = vmatprep.subr.mxu0 0.0
        %618 = vmatpush1.msra.mxu0 0.0
        %619 = vmatprep.subr.mxu0 0.0
        %620 = vmatpush1.msra.mxu0 0.0
        %621 = vmatprep.subr.mxu0 0.0
        %622 = vmatpush1.msra.mxu0 0.0
        %623 = vmatprep.subr.mxu0 0.0
        %624 = vmatpush1.msra.mxu0 0.0
        %625 = vmatprep.subr.mxu0 0.0
        %626 = vmatpush1.msra.mxu0 0.0
        %627 = vmatprep.subr.mxu0 0.0
        %628 = vmatpush1.msra.mxu0 0.0
        %629 = vmatprep.subr.mxu0 0.0
        %630 = vmatpush1.msra.mxu0 0.0
        %631 = vmatprep.subr.mxu0 0.0
        %632 = vmatpush1.msra.mxu0 0.0
        %633 = vmatprep.subr.mxu0 0.0
        %634 = vmatpush1.msra.mxu0 0.0
        %635 = vmatprep.subr.mxu0 0.0
        %636 = vmatpush1.msra.mxu0 0.0
        %637 = vmatprep.subr.mxu0 0.0
        %638 = vmatpush1.msra.mxu0 0.0
        %639 = vmatprep.subr.mxu0 0.0
        %640 = vmatpush1.msra.mxu0 0.0
        %641 = vmatprep.subr.mxu0 0.0
        %642 = vmatpush1.msra.mxu0 0.0
        %643 = vmatprep.subr.mxu0 0.0
        %644 = vmatpush1.msra.mxu0 0.0
        %645 = vmatprep.subr.mxu0 0.0
        %646 = vmatpush1.msra.mxu0 0.0
        %647 = vmatprep.subr.mxu0 0.0
        %648 = vmatpush1.msra.mxu0 0.0
        %649 = vmatprep.subr.mxu0 0.0
        %650 = vmatpush1.msra.mxu0 0.0
        %651 = vmatprep.subr.mxu0 0.0
        %652 = vmatpush1.msra.mxu0 0.0
        %653 = vmatprep.subr.mxu0 0.0
        %654 = vmatpush1.msra.mxu0 0.0
        %655 = vmatprep.mubr.f32.mxu0 0.0
        %656 = vmatmul.mubr.f32.gmra.mrb[0].mxu0 %v484
        %v657 = vpop.f32.mrb[0].mxu0
        %v658 = vadd.f32 0.0, %v657
        %v659 = vpop.f32.mrb[0].mxu0
        %v660 = vadd.f32 0.0, %v659
        %661 = vdwg.mxu0
        %v662 = vadd.f32 %v589, %v658
        %v663 = vadd.f32 %v590, %v660
        %v664 = vxor.u32 %v662, 2147483648
        %v665 = vmul.f32 %v664, 1.442695
        %v666 = vpow.pop %v665
        %v667 = vadd.f32 %v666, 1.0
        %v668 = vrcp.pop %v667
        %v669 = vmul.f32 1.0, %v668
        %v670 = vtanh.pop %v663
        %v671 = vxor.u32 %v663, 2147483648
        %v672 = vmul.f32 %v671, 1.442695
        %v673 = vpow.pop %v672
        %v674 = vadd.f32 %v673, 1.0
        %v675 = vrcp.pop %v674
        %v676 = vmul.f32 1.0, %v675
        %v677 = vmul.f32 %v669, %v467
        %v678 = vmul.f32 %v669, %v670
        %680 = vrot.lane.b32.xlu0 %v678, 64
        %v681 = vpop.permute.xlu0 %680
        %v683 = vadd.f32 %v677, %v681
        %v684 = vtanh.pop %v683
        %v685 = vmul.f32 %v676, %v684
        %687 = vrot.lane.b32.xlu0 %v685, 64
        %v688 = vpop.permute.xlu0 %687
        %v689 = vsel %vm367, %v688, 0
        %691 = vmatprep.subr.mxu0 %v346
        %692 = vmatpush1.msra.mxu0 %v345
        %693 = vmatprep.subr.mxu0 %v348
        %694 = vmatpush1.msra.mxu0 %v347
        %695 = vmatprep.subr.mxu0 %v350
        %696 = vmatpush1.msra.mxu0 %v349
        %697 = vmatprep.subr.mxu0 %v352
        %698 = vmatpush1.msra.mxu0 %v351
        %699 = vmatprep.subr.mxu0 %v354
        %700 = vmatpush1.msra.mxu0 %v353
        %701 = vmatprep.subr.mxu0 %v356
        %702 = vmatpush1.msra.mxu0 %v355
        %703 = vmatprep.subr.mxu0 %v358
        %704 = vmatpush1.msra.mxu0 %v357
        %705 = vmatprep.subr.mxu0 %v360
        %706 = vmatpush1.msra.mxu0 %v359
        %707 = vmatprep.subr.mxu0 0.0
        %708 = vmatpush1.msra.mxu0 0.0
        %709 = vmatprep.subr.mxu0 0.0
        %710 = vmatpush1.msra.mxu0 0.0
        %711 = vmatprep.subr.mxu0 0.0
        %712 = vmatpush1.msra.mxu0 0.0
        %713 = vmatprep.subr.mxu0 0.0
        %714 = vmatpush1.msra.mxu0 0.0
        %715 = vmatprep.subr.mxu0 0.0
        %716 = vmatpush1.msra.mxu0 0.0
        %717 = vmatprep.subr.mxu0 0.0
        %718 = vmatpush1.msra.mxu0 0.0
        %719 = vmatprep.subr.mxu0 0.0
        %720 = vmatpush1.msra.mxu0 0.0
        %721 = vmatprep.subr.mxu0 0.0
        %722 = vmatpush1.msra.mxu0 0.0
        %723 = vmatprep.subr.mxu0 0.0
        %724 = vmatpush1.msra.mxu0 0.0
        %725 = vmatprep.subr.mxu0 0.0
        %726 = vmatpush1.msra.mxu0 0.0
        %727 = vmatprep.subr.mxu0 0.0
        %728 = vmatpush1.msra.mxu0 0.0
        %729 = vmatprep.subr.mxu0 0.0
        %730 = vmatpush1.msra.mxu0 0.0
        %731 = vmatprep.subr.mxu0 0.0
        %732 = vmatpush1.msra.mxu0 0.0
        %733 = vmatprep.subr.mxu0 0.0
        %734 = vmatpush1.msra.mxu0 0.0
        %735 = vmatprep.subr.mxu0 0.0
        %736 = vmatpush1.msra.mxu0 0.0
        %737 = vmatprep.subr.mxu0 0.0
        %738 = vmatpush1.msra.mxu0 0.0
        %739 = vmatprep.subr.mxu0 0.0
        %740 = vmatpush1.msra.mxu0 0.0
        %741 = vmatprep.subr.mxu0 0.0
        %742 = vmatpush1.msra.mxu0 0.0
        %743 = vmatprep.subr.mxu0 0.0
        %744 = vmatpush1.msra.mxu0 0.0
        %745 = vmatprep.subr.mxu0 0.0
        %746 = vmatpush1.msra.mxu0 0.0
        %747 = vmatprep.subr.mxu0 0.0
        %748 = vmatpush1.msra.mxu0 0.0
        %749 = vmatprep.subr.mxu0 0.0
        %750 = vmatpush1.msra.mxu0 0.0
        %751 = vmatprep.subr.mxu0 0.0
        %752 = vmatpush1.msra.mxu0 0.0
        %753 = vmatprep.subr.mxu0 0.0
        %754 = vmatpush1.msra.mxu0 0.0
        %755 = vmatprep.mubr.f32.mxu0 0.0
        %756 = vmatmul.mubr.f32.gmra.mrb[0].mxu0 %v689
        %v757 = vpop.f32.mrb[0].mxu0
        %v758 = vadd.f32 %v474, %v757
        %v759 = vpop.f32.mrb[0].mxu0
        %v760 = vadd.f32 %v478, %v759
        %761 = vdwg.mxu0
        %v762 = vmax.f32 %v758, %v760
        %763 = vmax.xlane.f32.xlu0 %v762
        %v764 = vpop.xlane.xlu0 %763
        %v765 = vsub.f32 %v758, %v764
        %v766 = vsub.f32 %v760, %v764
        %v767 = vmul.f32 %v765, 1.442695
        %v768 = vpow.pop %v767
        %v769 = vmul.f32 %v766, 1.442695
        %v770 = vpow.pop %v769
        %v771 = vadd.f32 %v768, %v770
        %772 = vadd.xlane.f32.xlu0 %v771
        %v773 = vpop.xlane.xlu0 %772
        %v774 = vlog2.pop %v773
        %v775 = vmul.f32 %v774, 0.6931472
        %v776 = vadd.f32 %v764, %v775
        %s777 = scalar_lea.vmem %s318, 8
        %v778 = vld [vmem:[%s777] sm:$0xff]
        %779 = vset.pattern.permute.xlu0 0
        %780 = vperm.xlu0 %779, %v778
        %v781 = vpop.permute.xlu0 %780
        %vm782 = vcmp.eq.s32.totalorder %v574, %v781
        %vm783 = vcmp.eq.s32.totalorder %v575, %v781
        %v784 = vsel %vm782, %v758, 0.0
        %v785 = vsel %vm783, %v760, 0.0
        %v786 = vadd.f32 %v784, %v785
        %787 = vadd.xlane.f32.xlu0 %v786
        %v788 = vpop.xlane.xlu0 %787
        %v789 = vsub.f32 %v788, %v776
        %v790 = vadd.f32 %v587, %v789
        %s791 = scalar_lea.vmem %s278, 32 [#allocation2]
        %v792 = vld [vmem:[%s791] sm:$0xff]
        %v793 = vld [vmem:[%s791 + $0x8] sm:$0xff]
        %794 = vmatprep.subr.mxu0 %v330
        %795 = vmatpush1.msra.mxu0 %v329
        %796 = vmatprep.subr.mxu0 %v332
        %797 = vmatpush1.msra.mxu0 %v331
        %798 = vmatprep.subr.mxu0 %v334
        %799 = vmatpush1.msra.mxu0 %v333
        %800 = vmatprep.subr.mxu0 %v336
        %801 = vmatpush1.msra.mxu0 %v335
        %802 = vmatprep.subr.mxu0 %v338
        %803 = vmatpush1.msra.mxu0 %v337
        %804 = vmatprep.subr.mxu0 %v340
        %805 = vmatpush1.msra.mxu0 %v339
        %806 = vmatprep.subr.mxu0 %v342
        %807 = vmatpush1.msra.mxu0 %v341
        %808 = vmatprep.subr.mxu0 %v344
        %809 = vmatpush1.msra.mxu0 %v343
        %810 = vmatprep.subr.mxu0 0.0
        %811 = vmatpush1.msra.mxu0 0.0
        %812 = vmatprep.subr.mxu0 0.0
        %813 = vmatpush1.msra.mxu0 0.0
        %814 = vmatprep.subr.mxu0 0.0
        %815 = vmatpush1.msra.mxu0 0.0
        %816 = vmatprep.subr.mxu0 0.0
        %817 = vmatpush1.msra.mxu0 0.0
        %818 = vmatprep.subr.mxu0 0.0
        %819 = vmatpush1.msra.mxu0 0.0
        %820 = vmatprep.subr.mxu0 0.0
        %821 = vmatpush1.msra.mxu0 0.0
        %822 = vmatprep.subr.mxu0 0.0
        %823 = vmatpush1.msra.mxu0 0.0
        %824 = vmatprep.subr.mxu0 0.0
        %825 = vmatpush1.msra.mxu0 0.0
        %826 = vmatprep.subr.mxu0 0.0
        %827 = vmatpush1.msra.mxu0 0.0
        %828 = vmatprep.subr.mxu0 0.0
        %829 = vmatpush1.msra.mxu0 0.0
        %830 = vmatprep.subr.mxu0 0.0
        %831 = vmatpush1.msra.mxu0 0.0
        %832 = vmatprep.subr.mxu0 0.0
        %833 = vmatpush1.msra.mxu0 0.0
        %834 = vmatprep.subr.mxu0 0.0
        %835 = vmatpush1.msra.mxu0 0.0
        %836 = vmatprep.subr.mxu0 0.0
        %837 = vmatpush1.msra.mxu0 0.0
        %838 = vmatprep.subr.mxu0 0.0
        %839 = vmatpush1.msra.mxu0 0.0
        %840 = vmatprep.subr.mxu0 0.0
        %841 = vmatpush1.msra.mxu0 0.0
        %842 = vmatprep.subr.mxu0 0.0
        %843 = vmatpush1.msra.mxu0 0.0
        %844 = vmatprep.subr.mxu0 0.0
        %845 = vmatpush1.msra.mxu0 0.0
        %846 = vmatprep.subr.mxu0 0.0
        %847 = vmatpush1.msra.mxu0 0.0
        %848 = vmatprep.subr.mxu0 0.0
        %849 = vmatpush1.msra.mxu0 0.0
        %850 = vmatprep.subr.mxu0 0.0
        %851 = vmatpush1.msra.mxu0 0.0
        %852 = vmatprep.subr.mxu0 0.0
        %853 = vmatpush1.msra.mxu0 0.0
        %854 = vmatprep.subr.mxu0 0.0
        %855 = vmatpush1.msra.mxu0 0.0
        %856 = vmatprep.subr.mxu0 0.0
        %857 = vmatpush1.msra.mxu0 0.0
        %858 = vmatprep.mubr.f32.mxu0 0.0
        %859 = vmatmul.mubr.f32.gmra.mrb[0].mxu0 %v689
        %v860 = vpop.f32.mrb[0].mxu0
        %v861 = vadd.f32 0.0, %v860
        %v862 = vpop.f32.mrb[0].mxu0
        %v863 = vadd.f32 0.0, %v862
        %864 = vdwg.mxu0
        %v865 = vadd.f32 %v792, %v861
        %v866 = vadd.f32 %v793, %v863
        %v867 = vxor.u32 %v865, 2147483648
        %v868 = vmul.f32 %v867, 1.442695
        %v869 = vpow.pop %v868
        %v870 = vadd.f32 %v869, 1.0
        %v871 = vrcp.pop %v870
        %v872 = vmul.f32 1.0, %v871
        %v873 = vtanh.pop %v866
        %v874 = vxor.u32 %v866, 2147483648
        %v875 = vmul.f32 %v874, 1.442695
        %v876 = vpow.pop %v875
        %v877 = vadd.f32 %v876, 1.0
        %v878 = vrcp.pop %v877
        %v879 = vmul.f32 1.0, %v878
        %v880 = vmul.f32 %v872, %v683
        %v881 = vmul.f32 %v872, %v873
        %883 = vrot.lane.b32.xlu0 %v881, 64
        %v884 = vpop.permute.xlu0 %883
        %v886 = vadd.f32 %v880, %v884
        %v887 = vtanh.pop %v886
        %v888 = vmul.f32 %v879, %v887
        %890 = vrot.lane.b32.xlu0 %v888, 64
        %v891 = vpop.permute.xlu0 %890
        %v892 = vsel %vm367, %v891, 0
        %894 = vmatprep.subr.mxu0 %v346
        %895 = vmatpush1.msra.mxu0 %v345
        %896 = vmatprep.subr.mxu0 %v348
        %897 = vmatpush1.msra.mxu0 %v347
        %898 = vmatprep.subr.mxu0 %v350
        %899 = vmatpush1.msra.mxu0 %v349
        %900 = vmatprep.subr.mxu0 %v352
        %901 = vmatpush1.msra.mxu0 %v351
        %902 = vmatprep.subr.mxu0 %v354
        %903 = vmatpush1.msra.mxu0 %v353
        %904 = vmatprep.subr.mxu0 %v356
        %905 = vmatpush1.msra.mxu0 %v355
        %906 = vmatprep.subr.mxu0 %v358
        %907 = vmatpush1.msra.mxu0 %v357
        %908 = vmatprep.subr.mxu0 %v360
        %909 = vmatpush1.msra.mxu0 %v359
        %910 = vmatprep.subr.mxu0 0.0
        %911 = vmatpush1.msra.mxu0 0.0
        %912 = vmatprep.subr.mxu0 0.0
        %913 = vmatpush1.msra.mxu0 0.0
        %914 = vmatprep.subr.mxu0 0.0
        %915 = vmatpush1.msra.mxu0 0.0
        %916 = vmatprep.subr.mxu0 0.0
        %917 = vmatpush1.msra.mxu0 0.0
        %918 = vmatprep.subr.mxu0 0.0
        %919 = vmatpush1.msra.mxu0 0.0
        %920 = vmatprep.subr.mxu0 0.0
        %921 = vmatpush1.msra.mxu0 0.0
        %922 = vmatprep.subr.mxu0 0.0
        %923 = vmatpush1.msra.mxu0 0.0
        %924 = vmatprep.subr.mxu0 0.0
        %925 = vmatpush1.msra.mxu0 0.0
        %926 = vmatprep.subr.mxu0 0.0
        %927 = vmatpush1.msra.mxu0 0.0
        %928 = vmatprep.subr.mxu0 0.0
        %929 = vmatpush1.msra.mxu0 0.0
        %930 = vmatprep.subr.mxu0 0.0
        %931 = vmatpush1.msra.mxu0 0.0
        %932 = vmatprep.subr.mxu0 0.0
        %933 = vmatpush1.msra.mxu0 0.0
        %934 = vmatprep.subr.mxu0 0.0
        %935 = vmatpush1.msra.mxu0 0.0
        %936 = vmatprep.subr.mxu0 0.0
        %937 = vmatpush1.msra.mxu0 0.0
        %938 = vmatprep.subr.mxu0 0.0
        %939 = vmatpush1.msra.mxu0 0.0
        %940 = vmatprep.subr.mxu0 0.0
        %941 = vmatpush1.msra.mxu0 0.0
        %942 = vmatprep.subr.mxu0 0.0
        %943 = vmatpush1.msra.mxu0 0.0
        %944 = vmatprep.subr.mxu0 0.0
        %945 = vmatpush1.msra.mxu0 0.0
        %946 = vmatprep.subr.mxu0 0.0
        %947 = vmatpush1.msra.mxu0 0.0
        %948 = vmatprep.subr.mxu0 0.0
        %949 = vmatpush1.msra.mxu0 0.0
        %950 = vmatprep.subr.mxu0 0.0
        %951 = vmatpush1.msra.mxu0 0.0
        %952 = vmatprep.subr.mxu0 0.0
        %953 = vmatpush1.msra.mxu0 0.0
        %954 = vmatprep.subr.mxu0 0.0
        %955 = vmatpush1.msra.mxu0 0.0
        %956 = vmatprep.subr.mxu0 0.0
        %957 = vmatpush1.msra.mxu0 0.0
        %958 = vmatprep.mubr.f32.mxu0 0.0
        %959 = vmatmul.mubr.f32.gmra.mrb[0].mxu0 %v892
        %v960 = vpop.f32.mrb[0].mxu0
        %v961 = vadd.f32 %v474, %v960
        %v962 = vpop.f32.mrb[0].mxu0
        %v963 = vadd.f32 %v478, %v962
        %964 = vdwg.mxu0
        %v965 = vmax.f32 %v961, %v963
        %966 = vmax.xlane.f32.xlu0 %v965
        %v967 = vpop.xlane.xlu0 %966
        %v968 = vsub.f32 %v961, %v967
        %v969 = vsub.f32 %v963, %v967
        %v970 = vmul.f32 %v968, 1.442695
        %v971 = vpow.pop %v970
        %v972 = vmul.f32 %v969, 1.442695
        %v973 = vpow.pop %v972
        %v974 = vadd.f32 %v971, %v973
        %975 = vadd.xlane.f32.xlu0 %v974
        %v976 = vpop.xlane.xlu0 %975
        %v977 = vlog2.pop %v976
        %v978 = vmul.f32 %v977, 0.6931472
        %v979 = vadd.f32 %v967, %v978
        %s980 = scalar_lea.vmem %s318, 16
        %v981 = vld [vmem:[%s980] sm:$0xff]
        %982 = vset.pattern.permute.xlu0 0
        %983 = vperm.xlu0 %982, %v981
        %v984 = vpop.permute.xlu0 %983
        %vm985 = vcmp.eq.s32.totalorder %v574, %v984
        %vm986 = vcmp.eq.s32.totalorder %v575, %v984
        %v987 = vsel %vm985, %v961, 0.0
        %v988 = vsel %vm986, %v963, 0.0
        %v989 = vadd.f32 %v987, %v988
        %990 = vadd.xlane.f32.xlu0 %v989
        %v991 = vpop.xlane.xlu0 %990
        %v992 = vsub.f32 %v991, %v979
        %v993 = vadd.f32 %v790, %v992
        %s994 = scalar_lea.vmem %s278, 48 [#allocation2]
        %v995 = vld [vmem:[%s994] sm:$0xff]
        %v996 = vld [vmem:[%s994 + $0x8] sm:$0xff]
        %997 = vmatprep.subr.mxu0 %v330
        %998 = vmatpush1.msra.mxu0 %v329
        %999 = vmatprep.subr.mxu0 %v332
        %1000 = vmatpush1.msra.mxu0 %v331
        %1001 = vmatprep.subr.mxu0 %v334
        %1002 = vmatpush1.msra.mxu0 %v333
        %1003 = vmatprep.subr.mxu0 %v336
        %1004 = vmatpush1.msra.mxu0 %v335
        %1005 = vmatprep.subr.mxu0 %v338
        %1006 = vmatpush1.msra.mxu0 %v337
        %1007 = vmatprep.subr.mxu0 %v340
        %1008 = vmatpush1.msra.mxu0 %v339
        %1009 = vmatprep.subr.mxu0 %v342
        %1010 = vmatpush1.msra.mxu0 %v341
        %1011 = vmatprep.subr.mxu0 %v344
        %1012 = vmatpush1.msra.mxu0 %v343
        %1013 = vmatprep.subr.mxu0 0.0
        %1014 = vmatpush1.msra.mxu0 0.0
        %1015 = vmatprep.subr.mxu0 0.0
        %1016 = vmatpush1.msra.mxu0 0.0
        %1017 = vmatprep.subr.mxu0 0.0
        %1018 = vmatpush1.msra.mxu0 0.0
        %1019 = vmatprep.subr.mxu0 0.0
        %1020 = vmatpush1.msra.mxu0 0.0
        %1021 = vmatprep.subr.mxu0 0.0
        %1022 = vmatpush1.msra.mxu0 0.0
        %1023 = vmatprep.subr.mxu0 0.0
        %1024 = vmatpush1.msra.mxu0 0.0
        %1025 = vmatprep.subr.mxu0 0.0
        %1026 = vmatpush1.msra.mxu0 0.0
        %1027 = vmatprep.subr.mxu0 0.0
        %1028 = vmatpush1.msra.mxu0 0.0
        %1029 = vmatprep.subr.mxu0 0.0
        %1030 = vmatpush1.msra.mxu0 0.0
        %1031 = vmatprep.subr.mxu0 0.0
        %1032 = vmatpush1.msra.mxu0 0.0
        %1033 = vmatprep.subr.mxu0 0.0
        %1034 = vmatpush1.msra.mxu0 0.0
        %1035 = vmatprep.subr.mxu0 0.0
        %1036 = vmatpush1.msra.mxu0 0.0
        %1037 = vmatprep.subr.mxu0 0.0
        %1038 = vmatpush1.msra.mxu0 0.0
        %1039 = vmatprep.subr.mxu0 0.0
        %1040 = vmatpush1.msra.mxu0 0.0
        %1041 = vmatprep.subr.mxu0 0.0
        %1042 = vmatpush1.msra.mxu0 0.0
        %1043 = vmatprep.subr.mxu0 0.0
        %1044 = vmatpush1.msra.mxu0 0.0
        %1045 = vmatprep.subr.mxu0 0.0
        %1046 = vmatpush1.msra.mxu0 0.0
        %1047 = vmatprep.subr.mxu0 0.0
        %1048 = vmatpush1.msra.mxu0 0.0
        %1049 = vmatprep.subr.mxu0 0.0
        %1050 = vmatpush1.msra.mxu0 0.0
        %1051 = vmatprep.subr.mxu0 0.0
        %1052 = vmatpush1.msra.mxu0 0.0
        %1053 = vmatprep.subr.mxu0 0.0
        %1054 = vmatpush1.msra.mxu0 0.0
        %1055 = vmatprep.subr.mxu0 0.0
        %1056 = vmatpush1.msra.mxu0 0.0
        %1057 = vmatprep.subr.mxu0 0.0
        %1058 = vmatpush1.msra.mxu0 0.0
        %1059 = vmatprep.subr.mxu0 0.0
        %1060 = vmatpush1.msra.mxu0 0.0
        %1061 = vmatprep.mubr.f32.mxu0 0.0
        %1062 = vmatmul.mubr.f32.gmra.mrb[0].mxu0 %v892
        %v1063 = vpop.f32.mrb[0].mxu0
        %v1064 = vadd.f32 0.0, %v1063
        %v1065 = vpop.f32.mrb[0].mxu0
        %v1066 = vadd.f32 0.0, %v1065
        %1067 = vdwg.mxu0
        %v1068 = vadd.f32 %v995, %v1064
        %v1069 = vadd.f32 %v996, %v1066
        %v1070 = vxor.u32 %v1068, 2147483648
        %v1071 = vmul.f32 %v1070, 1.442695
        %v1072 = vpow.pop %v1071
        %v1073 = vadd.f32 %v1072, 1.0
        %v1074 = vrcp.pop %v1073
        %v1075 = vmul.f32 1.0, %v1074
        %v1076 = vtanh.pop %v1069
        %v1077 = vxor.u32 %v1069, 2147483648
        %v1078 = vmul.f32 %v1077, 1.442695
        %v1079 = vpow.pop %v1078
        %v1080 = vadd.f32 %v1079, 1.0
        %v1081 = vrcp.pop %v1080
        %v1082 = vmul.f32 1.0, %v1081
        %v1083 = vmul.f32 %v1075, %v886
        %v1084 = vmul.f32 %v1075, %v1076
        %1086 = vrot.lane.b32.xlu0 %v1084, 64
        %v1087 = vpop.permute.xlu0 %1086
        %v1089 = vadd.f32 %v1083, %v1087
        %v1090 = vtanh.pop %v1089
        %v1091 = vmul.f32 %v1082, %v1090
        %1093 = vrot.lane.b32.xlu0 %v1091, 64
        %v1094 = vpop.permute.xlu0 %1093
        %v1095 = vsel %vm367, %v1094, 0
        %1097 = vmatprep.subr.mxu0 %v346
        %1098 = vmatpush1.msra.mxu0 %v345
        %1099 = vmatprep.subr.mxu0 %v348
        %1100 = vmatpush1.msra.mxu0 %v347
        %1101 = vmatprep.subr.mxu0 %v350
        %1102 = vmatpush1.msra.mxu0 %v349
        %1103 = vmatprep.subr.mxu0 %v352
        %1104 = vmatpush1.msra.mxu0 %v351
        %1105 = vmatprep.subr.mxu0 %v354
        %1106 = vmatpush1.msra.mxu0 %v353
        %1107 = vmatprep.subr.mxu0 %v356
        %1108 = vmatpush1.msra.mxu0 %v355
        %1109 = vmatprep.subr.mxu0 %v358
        %1110 = vmatpush1.msra.mxu0 %v357
        %1111 = vmatprep.subr.mxu0 %v360
        %1112 = vmatpush1.msra.mxu0 %v359
        %1113 = vmatprep.subr.mxu0 0.0
        %1114 = vmatpush1.msra.mxu0 0.0
        %1115 = vmatprep.subr.mxu0 0.0
        %1116 = vmatpush1.msra.mxu0 0.0
        %1117 = vmatprep.subr.mxu0 0.0
        %1118 = vmatpush1.msra.mxu0 0.0
        %1119 = vmatprep.subr.mxu0 0.0
        %1120 = vmatpush1.msra.mxu0 0.0
        %1121 = vmatprep.subr.mxu0 0.0
        %1122 = vmatpush1.msra.mxu0 0.0
        %1123 = vmatprep.subr.mxu0 0.0
        %1124 = vmatpush1.msra.mxu0 0.0
        %1125 = vmatprep.subr.mxu0 0.0
        %1126 = vmatpush1.msra.mxu0 0.0
        %1127 = vmatprep.subr.mxu0 0.0
        %1128 = vmatpush1.msra.mxu0 0.0
        %1129 = vmatprep.subr.mxu0 0.0
        %1130 = vmatpush1.msra.mxu0 0.0
        %1131 = vmatprep.subr.mxu0 0.0
        %1132 = vmatpush1.msra.mxu0 0.0
        %1133 = vmatprep.subr.mxu0 0.0
        %1134 = vmatpush1.msra.mxu0 0.0
        %1135 = vmatprep.subr.mxu0 0.0
        %1136 = vmatpush1.msra.mxu0 0.0
        %1137 = vmatprep.subr.mxu0 0.0
        %1138 = vmatpush1.msra.mxu0 0.0
        %1139 = vmatprep.subr.mxu0 0.0
        %1140 = vmatpush1.msra.mxu0 0.0
        %1141 = vmatprep.subr.mxu0 0.0
        %1142 = vmatpush1.msra.mxu0 0.0
        %1143 = vmatprep.subr.mxu0 0.0
        %1144 = vmatpush1.msra.mxu0 0.0
        %1145 = vmatprep.subr.mxu0 0.0
        %1146 = vmatpush1.msra.mxu0 0.0
        %1147 = vmatprep.subr.mxu0 0.0
        %1148 = vmatpush1.msra.mxu0 0.0
        %1149 = vmatprep.subr.mxu0 0.0
        %1150 = vmatpush1.msra.mxu0 0.0
        %1151 = vmatprep.subr.mxu0 0.0
        %1152 = vmatpush1.msra.mxu0 0.0
        %1153 = vmatprep.subr.mxu0 0.0
        %1154 = vmatpush1.msra.mxu0 0.0
        %1155 = vmatprep.subr.mxu0 0.0
        %1156 = vmatpush1.msra.mxu0 0.0
        %1157 = vmatprep.subr.mxu0 0.0
        %1158 = vmatpush1.msra.mxu0 0.0
        %1159 = vmatprep.subr.mxu0 0.0
        %1160 = vmatpush1.msra.mxu0 0.0
        %1161 = vmatprep.mubr.f32.mxu0 0.0
        %1162 = vmatmul.mubr.f32.gmra.mrb[0].mxu0 %v1095
        %v1163 = vpop.f32.mrb[0].mxu0
        %v1164 = vadd.f32 %v474, %v1163
        %v1165 = vpop.f32.mrb[0].mxu0
        %v1166 = vadd.f32 %v478, %v1165
        %1167 = vdwg.mxu0
        %v1168 = vmax.f32 %v1164, %v1166
        %1169 = vmax.xlane.f32.xlu0 %v1168
        %v1170 = vpop.xlane.xlu0 %1169
        %v1171 = vsub.f32 %v1164, %v1170
        %v1172 = vsub.f32 %v1166, %v1170
        %v1173 = vmul.f32 %v1171, 1.442695
        %v1174 = vpow.pop %v1173
        %v1175 = vmul.f32 %v1172, 1.442695
        %v1176 = vpow.pop %v1175
        %v1177 = vadd.f32 %v1174, %v1176
        %1178 = vadd.xlane.f32.xlu0 %v1177
        %v1179 = vpop.xlane.xlu0 %1178
        %v1180 = vlog2.pop %v1179
        %v1181 = vmul.f32 %v1180, 0.6931472
        %v1182 = vadd.f32 %v1170, %v1181
        %s1183 = scalar_lea.vmem %s318, 24
        %v1184 = vld [vmem:[%s1183] sm:$0xff]
        %1185 = vset.pattern.permute.xlu0 0
        %1186 = vperm.xlu0 %1185, %v1184
        %v1187 = vpop.permute.xlu0 %1186
        %vm1188 = vcmp.eq.s32.totalorder %v574, %v1187
        %vm1189 = vcmp.eq.s32.totalorder %v575, %v1187
        %v1190 = vsel %vm1188, %v1164, 0.0
        %v1191 = vsel %vm1189, %v1166, 0.0
        %v1192 = vadd.f32 %v1190, %v1191
        %1193 = vadd.xlane.f32.xlu0 %v1192
        %v1194 = vpop.xlane.xlu0 %1193
        %v1195 = vsub.f32 %v1194, %v1182
        %v1196 = vadd.f32 %v993, %v1195
        %s1197 = scalar_lea.vmem %s278, 64 [#allocation2]
        %v1198 = vld [vmem:[%s1197] sm:$0xff]
        %v1199 = vld [vmem:[%s1197 + $0x8] sm:$0xff]
        %1200 = vmatprep.subr.mxu0 %v330
        %1201 = vmatpush1.msra.mxu0 %v329
        %1202 = vmatprep.subr.mxu0 %v332
        %1203 = vmatpush1.msra.mxu0 %v331
        %1204 = vmatprep.subr.mxu0 %v334
        %1205 = vmatpush1.msra.mxu0 %v333
        %1206 = vmatprep.subr.mxu0 %v336
        %1207 = vmatpush1.msra.mxu0 %v335
        %1208 = vmatprep.subr.mxu0 %v338
        %1209 = vmatpush1.msra.mxu0 %v337
        %1210 = vmatprep.subr.mxu0 %v340
        %1211 = vmatpush1.msra.mxu0 %v339
        %1212 = vmatprep.subr.mxu0 %v342
        %1213 = vmatpush1.msra.mxu0 %v341
        %1214 = vmatprep.subr.mxu0 %v344
        %1215 = vmatpush1.msra.mxu0 %v343
        %1216 = vmatprep.subr.mxu0 0.0
        %1217 = vmatpush1.msra.mxu0 0.0
        %1218 = vmatprep.subr.mxu0 0.0
        %1219 = vmatpush1.msra.mxu0 0.0
        %1220 = vmatprep.subr.mxu0 0.0
        %1221 = vmatpush1.msra.mxu0 0.0
        %1222 = vmatprep.subr.mxu0 0.0
        %1223 = vmatpush1.msra.mxu0 0.0
        %1224 = vmatprep.subr.mxu0 0.0
        %1225 = vmatpush1.msra.mxu0 0.0
        %1226 = vmatprep.subr.mxu0 0.0
        %1227 = vmatpush1.msra.mxu0 0.0
        %1228 = vmatprep.subr.mxu0 0.0
        %1229 = vmatpush1.msra.mxu0 0.0
        %1230 = vmatprep.subr.mxu0 0.0
        %1231 = vmatpush1.msra.mxu0 0.0
        %1232 = vmatprep.subr.mxu0 0.0
        %1233 = vmatpush1.msra.mxu0 0.0
        %1234 = vmatprep.subr.mxu0 0.0
        %1235 = vmatpush1.msra.mxu0 0.0
        %1236 = vmatprep.subr.mxu0 0.0
        %1237 = vmatpush1.msra.mxu0 0.0
        %1238 = vmatprep.subr.mxu0 0.0
        %1239 = vmatpush1.msra.mxu0 0.0
        %1240 = vmatprep.subr.mxu0 0.0
        %1241 = vmatpush1.msra.mxu0 0.0
        %1242 = vmatprep.subr.mxu0 0.0
        %1243 = vmatpush1.msra.mxu0 0.0
        %1244 = vmatprep.subr.mxu0 0.0
        %1245 = vmatpush1.msra.mxu0 0.0
        %1246 = vmatprep.subr.mxu0 0.0
        %1247 = vmatpush1.msra.mxu0 0.0
        %1248 = vmatprep.subr.mxu0 0.0
        %1249 = vmatpush1.msra.mxu0 0.0
        %1250 = vmatprep.subr.mxu0 0.0
        %1251 = vmatpush1.msra.mxu0 0.0
        %1252 = vmatprep.subr.mxu0 0.0
        %1253 = vmatpush1.msra.mxu0 0.0
        %1254 = vmatprep.subr.mxu0 0.0
        %1255 = vmatpush1.msra.mxu0 0.0
        %1256 = vmatprep.subr.mxu0 0.0
        %1257 = vmatpush1.msra.mxu0 0.0
        %1258 = vmatprep.subr.mxu0 0.0
        %1259 = vmatpush1.msra.mxu0 0.0
        %1260 = vmatprep.subr.mxu0 0.0
        %1261 = vmatpush1.msra.mxu0 0.0
        %1262 = vmatprep.subr.mxu0 0.0
        %1263 = vmatpush1.msra.mxu0 0.0
        %1264 = vmatprep.mubr.f32.mxu0 0.0
        %1265 = vmatmul.mubr.f32.gmra.mrb[0].mxu0 %v1095
        %v1266 = vpop.f32.mrb[0].mxu0
        %v1267 = vadd.f32 0.0, %v1266
        %v1268 = vpop.f32.mrb[0].mxu0
        %v1269 = vadd.f32 0.0, %v1268
        %1270 = vdwg.mxu0
        %v1271 = vadd.f32 %v1198, %v1267
        %v1272 = vadd.f32 %v1199, %v1269
        %v1273 = vxor.u32 %v1271, 2147483648
        %v1274 = vmul.f32 %v1273, 1.442695
        %v1275 = vpow.pop %v1274
        %v1276 = vadd.f32 %v1275, 1.0
        %v1277 = vrcp.pop %v1276
        %v1278 = vmul.f32 1.0, %v1277
        %v1279 = vtanh.pop %v1272
        %v1280 = vxor.u32 %v1272, 2147483648
        %v1281 = vmul.f32 %v1280, 1.442695
        %v1282 = vpow.pop %v1281
        %v1283 = vadd.f32 %v1282, 1.0
        %v1284 = vrcp.pop %v1283
        %v1285 = vmul.f32 1.0, %v1284
        %v1286 = vmul.f32 %v1278, %v1089
        %v1287 = vmul.f32 %v1278, %v1279
        %1289 = vrot.lane.b32.xlu0 %v1287, 64
        %v1290 = vpop.permute.xlu0 %1289
        %v1292 = vadd.f32 %v1286, %v1290
        %v1293 = vtanh.pop %v1292
        %v1294 = vmul.f32 %v1285, %v1293
        %1296 = vrot.lane.b32.xlu0 %v1294, 64
        %v1297 = vpop.permute.xlu0 %1296
        %v1298 = vsel %vm367, %v1297, 0
        %1300 = vmatprep.subr.mxu0 %v346
        %1301 = vmatpush1.msra.mxu0 %v345
        %1302 = vmatprep.subr.mxu0 %v348
        %1303 = vmatpush1.msra.mxu0 %v347
        %1304 = vmatprep.subr.mxu0 %v350
        %1305 = vmatpush1.msra.mxu0 %v349
        %1306 = vmatprep.subr.mxu0 %v352
        %1307 = vmatpush1.msra.mxu0 %v351
        %1308 = vmatprep.subr.mxu0 %v354
        %1309 = vmatpush1.msra.mxu0 %v353
        %1310 = vmatprep.subr.mxu0 %v356
        %1311 = vmatpush1.msra.mxu0 %v355
        %1312 = vmatprep.subr.mxu0 %v358
        %1313 = vmatpush1.msra.mxu0 %v357
        %1314 = vmatprep.subr.mxu0 %v360
        %1315 = vmatpush1.msra.mxu0 %v359
        %1316 = vmatprep.subr.mxu0 0.0
        %1317 = vmatpush1.msra.mxu0 0.0
        %1318 = vmatprep.subr.mxu0 0.0
        %1319 = vmatpush1.msra.mxu0 0.0
        %1320 = vmatprep.subr.mxu0 0.0
        %1321 = vmatpush1.msra.mxu0 0.0
        %1322 = vmatprep.subr.mxu0 0.0
        %1323 = vmatpush1.msra.mxu0 0.0
        %1324 = vmatprep.subr.mxu0 0.0
        %1325 = vmatpush1.msra.mxu0 0.0
        %1326 = vmatprep.subr.mxu0 0.0
        %1327 = vmatpush1.msra.mxu0 0.0
        %1328 = vmatprep.subr.mxu0 0.0
        %1329 = vmatpush1.msra.mxu0 0.0
        %1330 = vmatprep.subr.mxu0 0.0
        %1331 = vmatpush1.msra.mxu0 0.0
        %1332 = vmatprep.subr.mxu0 0.0
        %1333 = vmatpush1.msra.mxu0 0.0
        %1334 = vmatprep.subr.mxu0 0.0
        %1335 = vmatpush1.msra.mxu0 0.0
        %1336 = vmatprep.subr.mxu0 0.0
        %1337 = vmatpush1.msra.mxu0 0.0
        %1338 = vmatprep.subr.mxu0 0.0
        %1339 = vmatpush1.msra.mxu0 0.0
        %1340 = vmatprep.subr.mxu0 0.0
        %1341 = vmatpush1.msra.mxu0 0.0
        %1342 = vmatprep.subr.mxu0 0.0
        %1343 = vmatpush1.msra.mxu0 0.0
        %1344 = vmatprep.subr.mxu0 0.0
        %1345 = vmatpush1.msra.mxu0 0.0
        %1346 = vmatprep.subr.mxu0 0.0
        %1347 = vmatpush1.msra.mxu0 0.0
        %1348 = vmatprep.subr.mxu0 0.0
        %1349 = vmatpush1.msra.mxu0 0.0
        %1350 = vmatprep.subr.mxu0 0.0
        %1351 = vmatpush1.msra.mxu0 0.0
        %1352 = vmatprep.subr.mxu0 0.0
        %1353 = vmatpush1.msra.mxu0 0.0
        %1354 = vmatprep.subr.mxu0 0.0
        %1355 = vmatpush1.msra.mxu0 0.0
        %1356 = vmatprep.subr.mxu0 0.0
        %1357 = vmatpush1.msra.mxu0 0.0
        %1358 = vmatprep.subr.mxu0 0.0
        %1359 = vmatpush1.msra.mxu0 0.0
        %1360 = vmatprep.subr.mxu0 0.0
        %1361 = vmatpush1.msra.mxu0 0.0
        %1362 = vmatprep.subr.mxu0 0.0
        %1363 = vmatpush1.msra.mxu0 0.0
        %1364 = vmatprep.mubr.f32.mxu0 0.0
        %1365 = vmatmul.mubr.f32.gmra.mrb[0].mxu0 %v1298
        %v1366 = vpop.f32.mrb[0].mxu0
        %v1367 = vadd.f32 %v474, %v1366
        %v1368 = vpop.f32.mrb[0].mxu0
        %v1369 = vadd.f32 %v478, %v1368
        %1370 = vdwg.mxu0
        %v1371 = vmax.f32 %v1367, %v1369
        %1372 = vmax.xlane.f32.xlu0 %v1371
        %v1373 = vpop.xlane.xlu0 %1372
        %v1374 = vsub.f32 %v1367, %v1373
        %v1375 = vsub.f32 %v1369, %v1373
        %v1376 = vmul.f32 %v1374, 1.442695
        %v1377 = vpow.pop %v1376
        %v1378 = vmul.f32 %v1375, 1.442695
        %v1379 = vpow.pop %v1378
        %v1380 = vadd.f32 %v1377, %v1379
        %1381 = vadd.xlane.f32.xlu0 %v1380
        %v1382 = vpop.xlane.xlu0 %1381
        %v1383 = vlog2.pop %v1382
        %v1384 = vmul.f32 %v1383, 0.6931472
        %v1385 = vadd.f32 %v1373, %v1384
        %s1386 = scalar_lea.vmem %s318, 32
        %v1387 = vld [vmem:[%s1386] sm:$0xff]
        %1388 = vset.pattern.permute.xlu0 0
        %1389 = vperm.xlu0 %1388, %v1387
        %v1390 = vpop.permute.xlu0 %1389
        %vm1391 = vcmp.eq.s32.totalorder %v574, %v1390
        %vm1392 = vcmp.eq.s32.totalorder %v575, %v1390
        %v1393 = vsel %vm1391, %v1367, 0.0
        %v1394 = vsel %vm1392, %v1369, 0.0
        %v1395 = vadd.f32 %v1393, %v1394
        %1396 = vadd.xlane.f32.xlu0 %v1395
        %v1397 = vpop.xlane.xlu0 %1396
        %v1398 = vsub.f32 %v1397, %v1385
        %v1399 = vadd.f32 %v1196, %v1398
        %s1400 = scalar_lea.vmem %s278, 80 [#allocation2]
        %v1401 = vld [vmem:[%s1400] sm:$0xff]
        %v1402 = vld [vmem:[%s1400 + $0x8] sm:$0xff]
        %1403 = vmatprep.subr.mxu0 %v330
        %1404 = vmatpush1.msra.mxu0 %v329
        %1405 = vmatprep.subr.mxu0 %v332
        %1406 = vmatpush1.msra.mxu0 %v331
        %1407 = vmatprep.subr.mxu0 %v334
        %1408 = vmatpush1.msra.mxu0 %v333
        %1409 = vmatprep.subr.mxu0 %v336
        %1410 = vmatpush1.msra.mxu0 %v335
        %1411 = vmatprep.subr.mxu0 %v338
        %1412 = vmatpush1.msra.mxu0 %v337
        %1413 = vmatprep.subr.mxu0 %v340
        %1414 = vmatpush1.msra.mxu0 %v339
        %1415 = vmatprep.subr.mxu0 %v342
        %1416 = vmatpush1.msra.mxu0 %v341
        %1417 = vmatprep.subr.mxu0 %v344
        %1418 = vmatpush1.msra.mxu0 %v343
        %1419 = vmatprep.subr.mxu0 0.0
        %1420 = vmatpush1.msra.mxu0 0.0
        %1421 = vmatprep.subr.mxu0 0.0
        %1422 = vmatpush1.msra.mxu0 0.0
        %1423 = vmatprep.subr.mxu0 0.0
        %1424 = vmatpush1.msra.mxu0 0.0
        %1425 = vmatprep.subr.mxu0 0.0
        %1426 = vmatpush1.msra.mxu0 0.0
        %1427 = vmatprep.subr.mxu0 0.0
        %1428 = vmatpush1.msra.mxu0 0.0
        %1429 = vmatprep.subr.mxu0 0.0
        %1430 = vmatpush1.msra.mxu0 0.0
        %1431 = vmatprep.subr.mxu0 0.0
        %1432 = vmatpush1.msra.mxu0 0.0
        %1433 = vmatprep.subr.mxu0 0.0
        %1434 = vmatpush1.msra.mxu0 0.0
        %1435 = vmatprep.subr.mxu0 0.0
        %1436 = vmatpush1.msra.mxu0 0.0
        %1437 = vmatprep.subr.mxu0 0.0
        %1438 = vmatpush1.msra.mxu0 0.0
        %1439 = vmatprep.subr.mxu0 0.0
        %1440 = vmatpush1.msra.mxu0 0.0
        %1441 = vmatprep.subr.mxu0 0.0
        %1442 = vmatpush1.msra.mxu0 0.0
        %1443 = vmatprep.subr.mxu0 0.0
        %1444 = vmatpush1.msra.mxu0 0.0
        %1445 = vmatprep.subr.mxu0 0.0
        %1446 = vmatpush1.msra.mxu0 0.0
        %1447 = vmatprep.subr.mxu0 0.0
        %1448 = vmatpush1.msra.mxu0 0.0
        %1449 = vmatprep.subr.mxu0 0.0
        %1450 = vmatpush1.msra.mxu0 0.0
        %1451 = vmatprep.subr.mxu0 0.0
        %1452 = vmatpush1.msra.mxu0 0.0
        %1453 = vmatprep.subr.mxu0 0.0
        %1454 = vmatpush1.msra.mxu0 0.0
        %1455 = vmatprep.subr.mxu0 0.0
        %1456 = vmatpush1.msra.mxu0 0.0
        %1457 = vmatprep.subr.mxu0 0.0
        %1458 = vmatpush1.msra.mxu0 0.0
        %1459 = vmatprep.subr.mxu0 0.0
        %1460 = vmatpush1.msra.mxu0 0.0
        %1461 = vmatprep.subr.mxu0 0.0
        %1462 = vmatpush1.msra.mxu0 0.0
        %1463 = vmatprep.subr.mxu0 0.0
        %1464 = vmatpush1.msra.mxu0 0.0
        %1465 = vmatprep.subr.mxu0 0.0
        %1466 = vmatpush1.msra.mxu0 0.0
        %1467 = vmatprep.mubr.f32.mxu0 0.0
        %1468 = vmatmul.mubr.f32.gmra.mrb[0].mxu0 %v1298
        %v1469 = vpop.f32.mrb[0].mxu0
        %v1470 = vadd.f32 0.0, %v1469
        %v1471 = vpop.f32.mrb[0].mxu0
        %v1472 = vadd.f32 0.0, %v1471
        %1473 = vdwg.mxu0
        %v1474 = vadd.f32 %v1401, %v1470
        %v1475 = vadd.f32 %v1402, %v1472
        %v1476 = vxor.u32 %v1474, 2147483648
        %v1477 = vmul.f32 %v1476, 1.442695
        %v1478 = vpow.pop %v1477
        %v1479 = vadd.f32 %v1478, 1.0
        %v1480 = vrcp.pop %v1479
        %v1481 = vmul.f32 1.0, %v1480
        %v1482 = vtanh.pop %v1475
        %v1483 = vxor.u32 %v1475, 2147483648
        %v1484 = vmul.f32 %v1483, 1.442695
        %v1485 = vpow.pop %v1484
        %v1486 = vadd.f32 %v1485, 1.0
        %v1487 = vrcp.pop %v1486
        %v1488 = vmul.f32 1.0, %v1487
        %v1489 = vmul.f32 %v1481, %v1292
        %v1490 = vmul.f32 %v1481, %v1482
        %1492 = vrot.lane.b32.xlu0 %v1490, 64
        %v1493 = vpop.permute.xlu0 %1492
        %v1495 = vadd.f32 %v1489, %v1493
        %v1496 = vtanh.pop %v1495
        %v1497 = vmul.f32 %v1488, %v1496
        %1499 = vrot.lane.b32.xlu0 %v1497, 64
        %v1500 = vpop.permute.xlu0 %1499
        %v1501 = vsel %vm367, %v1500, 0
        %1503 = vmatprep.subr.mxu0 %v346
        %1504 = vmatpush1.msra.mxu0 %v345
        %1505 = vmatprep.subr.mxu0 %v348
        %1506 = vmatpush1.msra.mxu0 %v347
        %1507 = vmatprep.subr.mxu0 %v350
        %1508 = vmatpush1.msra.mxu0 %v349
        %1509 = vmatprep.subr.mxu0 %v352
        %1510 = vmatpush1.msra.mxu0 %v351
        %1511 = vmatprep.subr.mxu0 %v354
        %1512 = vmatpush1.msra.mxu0 %v353
        %1513 = vmatprep.subr.mxu0 %v356
        %1514 = vmatpush1.msra.mxu0 %v355
        %1515 = vmatprep.subr.mxu0 %v358
        %1516 = vmatpush1.msra.mxu0 %v357
        %1517 = vmatprep.subr.mxu0 %v360
        %1518 = vmatpush1.msra.mxu0 %v359
        %1519 = vmatprep.subr.mxu0 0.0
        %1520 = vmatpush1.msra.mxu0 0.0
        %1521 = vmatprep.subr.mxu0 0.0
        %1522 = vmatpush1.msra.mxu0 0.0
        %1523 = vmatprep.subr.mxu0 0.0
        %1524 = vmatpush1.msra.mxu0 0.0
        %1525 = vmatprep.subr.mxu0 0.0
        %1526 = vmatpush1.msra.mxu0 0.0
        %1527 = vmatprep.subr.mxu0 0.0
        %1528 = vmatpush1.msra.mxu0 0.0
        %1529 = vmatprep.subr.mxu0 0.0
        %1530 = vmatpush1.msra.mxu0 0.0
        %1531 = vmatprep.subr.mxu0 0.0
        %1532 = vmatpush1.msra.mxu0 0.0
        %1533 = vmatprep.subr.mxu0 0.0
        %1534 = vmatpush1.msra.mxu0 0.0
        %1535 = vmatprep.subr.mxu0 0.0
        %1536 = vmatpush1.msra.mxu0 0.0
        %1537 = vmatprep.subr.mxu0 0.0
        %1538 = vmatpush1.msra.mxu0 0.0
        %1539 = vmatprep.subr.mxu0 0.0
        %1540 = vmatpush1.msra.mxu0 0.0
        %1541 = vmatprep.subr.mxu0 0.0
        %1542 = vmatpush1.msra.mxu0 0.0
        %1543 = vmatprep.subr.mxu0 0.0
        %1544 = vmatpush1.msra.mxu0 0.0
        %1545 = vmatprep.subr.mxu0 0.0
        %1546 = vmatpush1.msra.mxu0 0.0
        %1547 = vmatprep.subr.mxu0 0.0
        %1548 = vmatpush1.msra.mxu0 0.0
        %1549 = vmatprep.subr.mxu0 0.0
        %1550 = vmatpush1.msra.mxu0 0.0
        %1551 = vmatprep.subr.mxu0 0.0
        %1552 = vmatpush1.msra.mxu0 0.0
        %1553 = vmatprep.subr.mxu0 0.0
        %1554 = vmatpush1.msra.mxu0 0.0
        %1555 = vmatprep.subr.mxu0 0.0
        %1556 = vmatpush1.msra.mxu0 0.0
        %1557 = vmatprep.subr.mxu0 0.0
        %1558 = vmatpush1.msra.mxu0 0.0
        %1559 = vmatprep.subr.mxu0 0.0
        %1560 = vmatpush1.msra.mxu0 0.0
        %1561 = vmatprep.subr.mxu0 0.0
        %1562 = vmatpush1.msra.mxu0 0.0
        %1563 = vmatprep.subr.mxu0 0.0
        %1564 = vmatpush1.msra.mxu0 0.0
        %1565 = vmatprep.subr.mxu0 0.0
        %1566 = vmatpush1.msra.mxu0 0.0
        %1567 = vmatprep.mubr.f32.mxu0 0.0
        %1568 = vmatmul.mubr.f32.gmra.mrb[0].mxu0 %v1501
        %v1569 = vpop.f32.mrb[0].mxu0
        %v1570 = vadd.f32 %v474, %v1569
        %v1571 = vpop.f32.mrb[0].mxu0
        %v1572 = vadd.f32 %v478, %v1571
        %1573 = vdwg.mxu0
        %v1574 = vmax.f32 %v1570, %v1572
        %1575 = vmax.xlane.f32.xlu0 %v1574
        %v1576 = vpop.xlane.xlu0 %1575
        %v1577 = vsub.f32 %v1570, %v1576
        %v1578 = vsub.f32 %v1572, %v1576
        %v1579 = vmul.f32 %v1577, 1.442695
        %v1580 = vpow.pop %v1579
        %v1581 = vmul.f32 %v1578, 1.442695
        %v1582 = vpow.pop %v1581
        %v1583 = vadd.f32 %v1580, %v1582
        %1584 = vadd.xlane.f32.xlu0 %v1583
        %v1585 = vpop.xlane.xlu0 %1584
        %v1586 = vlog2.pop %v1585
        %v1587 = vmul.f32 %v1586, 0.6931472
        %v1588 = vadd.f32 %v1576, %v1587
        %s1589 = scalar_lea.vmem %s318, 40
        %v1590 = vld [vmem:[%s1589] sm:$0xff]
        %1591 = vset.pattern.permute.xlu0 0
        %1592 = vperm.xlu0 %1591, %v1590
        %v1593 = vpop.permute.xlu0 %1592
        %vm1594 = vcmp.eq.s32.totalorder %v574, %v1593
        %vm1595 = vcmp.eq.s32.totalorder %v575, %v1593
        %v1596 = vsel %vm1594, %v1570, 0.0
        %v1597 = vsel %vm1595, %v1572, 0.0
        %v1598 = vadd.f32 %v1596, %v1597
        %1599 = vadd.xlane.f32.xlu0 %v1598
        %v1600 = vpop.xlane.xlu0 %1599
        %v1601 = vsub.f32 %v1600, %v1588
        %v1602 = vadd.f32 %v1399, %v1601
        %s1603 = scalar_lea.vmem %s278, 96 [#allocation2]
        %v1604 = vld [vmem:[%s1603] sm:$0xff]
        %v1605 = vld [vmem:[%s1603 + $0x8] sm:$0xff]
        %1606 = vmatprep.subr.mxu0 %v330
        %1607 = vmatpush1.msra.mxu0 %v329
        %1608 = vmatprep.subr.mxu0 %v332
        %1609 = vmatpush1.msra.mxu0 %v331
        %1610 = vmatprep.subr.mxu0 %v334
        %1611 = vmatpush1.msra.mxu0 %v333
        %1612 = vmatprep.subr.mxu0 %v336
        %1613 = vmatpush1.msra.mxu0 %v335
        %1614 = vmatprep.subr.mxu0 %v338
        %1615 = vmatpush1.msra.mxu0 %v337
        %1616 = vmatprep.subr.mxu0 %v340
        %1617 = vmatpush1.msra.mxu0 %v339
        %1618 = vmatprep.subr.mxu0 %v342
        %1619 = vmatpush1.msra.mxu0 %v341
        %1620 = vmatprep.subr.mxu0 %v344
        %1621 = vmatpush1.msra.mxu0 %v343
        %1622 = vmatprep.subr.mxu0 0.0
        %1623 = vmatpush1.msra.mxu0 0.0
        %1624 = vmatprep.subr.mxu0 0.0
        %1625 = vmatpush1.msra.mxu0 0.0
        %1626 = vmatprep.subr.mxu0 0.0
        %1627 = vmatpush1.msra.mxu0 0.0
        %1628 = vmatprep.subr.mxu0 0.0
        %1629 = vmatpush1.msra.mxu0 0.0
        %1630 = vmatprep.subr.mxu0 0.0
        %1631 = vmatpush1.msra.mxu0 0.0
        %1632 = vmatprep.subr.mxu0 0.0
        %1633 = vmatpush1.msra.mxu0 0.0
        %1634 = vmatprep.subr.mxu0 0.0
        %1635 = vmatpush1.msra.mxu0 0.0
        %1636 = vmatprep.subr.mxu0 0.0
        %1637 = vmatpush1.msra.mxu0 0.0
        %1638 = vmatprep.subr.mxu0 0.0
        %1639 = vmatpush1.msra.mxu0 0.0
        %1640 = vmatprep.subr.mxu0 0.0
        %1641 = vmatpush1.msra.mxu0 0.0
        %1642 = vmatprep.subr.mxu0 0.0
        %1643 = vmatpush1.msra.mxu0 0.0
        %1644 = vmatprep.subr.mxu0 0.0
        %1645 = vmatpush1.msra.mxu0 0.0
        %1646 = vmatprep.subr.mxu0 0.0
        %1647 = vmatpush1.msra.mxu0 0.0
        %1648 = vmatprep.subr.mxu0 0.0
        %1649 = vmatpush1.msra.mxu0 0.0
        %1650 = vmatprep.subr.mxu0 0.0
        %1651 = vmatpush1.msra.mxu0 0.0
        %1652 = vmatprep.subr.mxu0 0.0
        %1653 = vmatpush1.msra.mxu0 0.0
        %1654 = vmatprep.subr.mxu0 0.0
        %1655 = vmatpush1.msra.mxu0 0.0
        %1656 = vmatprep.subr.mxu0 0.0
        %1657 = vmatpush1.msra.mxu0 0.0
        %1658 = vmatprep.subr.mxu0 0.0
        %1659 = vmatpush1.msra.mxu0 0.0
        %1660 = vmatprep.subr.mxu0 0.0
        %1661 = vmatpush1.msra.mxu0 0.0
        %1662 = vmatprep.subr.mxu0 0.0
        %1663 = vmatpush1.msra.mxu0 0.0
        %1664 = vmatprep.subr.mxu0 0.0
        %1665 = vmatpush1.msra.mxu0 0.0
        %1666 = vmatprep.subr.mxu0 0.0
        %1667 = vmatpush1.msra.mxu0 0.0
        %1668 = vmatprep.subr.mxu0 0.0
        %1669 = vmatpush1.msra.mxu0 0.0
        %1670 = vmatprep.mubr.f32.mxu0 0.0
        %1671 = vmatmul.mubr.f32.gmra.mrb[0].mxu0 %v1501
        %v1672 = vpop.f32.mrb[0].mxu0
        %v1673 = vadd.f32 0.0, %v1672
        %v1674 = vpop.f32.mrb[0].mxu0
        %v1675 = vadd.f32 0.0, %v1674
        %1676 = vdwg.mxu0
        %v1677 = vadd.f32 %v1604, %v1673
        %v1678 = vadd.f32 %v1605, %v1675
        %v1679 = vxor.u32 %v1677, 2147483648
        %v1680 = vmul.f32 %v1679, 1.442695
        %v1681 = vpow.pop %v1680
        %v1682 = vadd.f32 %v1681, 1.0
        %v1683 = vrcp.pop %v1682
        %v1684 = vmul.f32 1.0, %v1683
        %v1685 = vtanh.pop %v1678
        %v1686 = vxor.u32 %v1678, 2147483648
        %v1687 = vmul.f32 %v1686, 1.442695
        %v1688 = vpow.pop %v1687
        %v1689 = vadd.f32 %v1688, 1.0
        %v1690 = vrcp.pop %v1689
        %v1691 = vmul.f32 1.0, %v1690
        %v1692 = vmul.f32 %v1684, %v1495
        %v1693 = vmul.f32 %v1684, %v1685
        %1695 = vrot.lane.b32.xlu0 %v1693, 64
        %v1696 = vpop.permute.xlu0 %1695
        %v1698 = vadd.f32 %v1692, %v1696
        %v1699 = vtanh.pop %v1698
        %v1700 = vmul.f32 %v1691, %v1699
        %1702 = vrot.lane.b32.xlu0 %v1700, 64
        %v1703 = vpop.permute.xlu0 %1702
        %v1704 = vsel %vm367, %v1703, 0
        %1706 = vmatprep.subr.mxu0 %v346
        %1707 = vmatpush1.msra.mxu0 %v345
        %1708 = vmatprep.subr.mxu0 %v348
        %1709 = vmatpush1.msra.mxu0 %v347
        %1710 = vmatprep.subr.mxu0 %v350
        %1711 = vmatpush1.msra.mxu0 %v349
        %1712 = vmatprep.subr.mxu0 %v352
        %1713 = vmatpush1.msra.mxu0 %v351
        %1714 = vmatprep.subr.mxu0 %v354
        %1715 = vmatpush1.msra.mxu0 %v353
        %1716 = vmatprep.subr.mxu0 %v356
        %1717 = vmatpush1.msra.mxu0 %v355
        %1718 = vmatprep.subr.mxu0 %v358
        %1719 = vmatpush1.msra.mxu0 %v357
        %1720 = vmatprep.subr.mxu0 %v360
        %1721 = vmatpush1.msra.mxu0 %v359
        %1722 = vmatprep.subr.mxu0 0.0
        %1723 = vmatpush1.msra.mxu0 0.0
        %1724 = vmatprep.subr.mxu0 0.0
        %1725 = vmatpush1.msra.mxu0 0.0
        %1726 = vmatprep.subr.mxu0 0.0
        %1727 = vmatpush1.msra.mxu0 0.0
        %1728 = vmatprep.subr.mxu0 0.0
        %1729 = vmatpush1.msra.mxu0 0.0
        %1730 = vmatprep.subr.mxu0 0.0
        %1731 = vmatpush1.msra.mxu0 0.0
        %1732 = vmatprep.subr.mxu0 0.0
        %1733 = vmatpush1.msra.mxu0 0.0
        %1734 = vmatprep.subr.mxu0 0.0
        %1735 = vmatpush1.msra.mxu0 0.0
        %1736 = vmatprep.subr.mxu0 0.0
        %1737 = vmatpush1.msra.mxu0 0.0
        %1738 = vmatprep.subr.mxu0 0.0
        %1739 = vmatpush1.msra.mxu0 0.0
        %1740 = vmatprep.subr.mxu0 0.0
        %1741 = vmatpush1.msra.mxu0 0.0
        %1742 = vmatprep.subr.mxu0 0.0
        %1743 = vmatpush1.msra.mxu0 0.0
        %1744 = vmatprep.subr.mxu0 0.0
        %1745 = vmatpush1.msra.mxu0 0.0
        %1746 = vmatprep.subr.mxu0 0.0
        %1747 = vmatpush1.msra.mxu0 0.0
        %1748 = vmatprep.subr.mxu0 0.0
        %1749 = vmatpush1.msra.mxu0 0.0
        %1750 = vmatprep.subr.mxu0 0.0
        %1751 = vmatpush1.msra.mxu0 0.0
        %1752 = vmatprep.subr.mxu0 0.0
        %1753 = vmatpush1.msra.mxu0 0.0
        %1754 = vmatprep.subr.mxu0 0.0
        %1755 = vmatpush1.msra.mxu0 0.0
        %1756 = vmatprep.subr.mxu0 0.0
        %1757 = vmatpush1.msra.mxu0 0.0
        %1758 = vmatprep.subr.mxu0 0.0
        %1759 = vmatpush1.msra.mxu0 0.0
        %1760 = vmatprep.subr.mxu0 0.0
        %1761 = vmatpush1.msra.mxu0 0.0
        %1762 = vmatprep.subr.mxu0 0.0
        %1763 = vmatpush1.msra.mxu0 0.0
        %1764 = vmatprep.subr.mxu0 0.0
        %1765 = vmatpush1.msra.mxu0 0.0
        %1766 = vmatprep.subr.mxu0 0.0
        %1767 = vmatpush1.msra.mxu0 0.0
        %1768 = vmatprep.subr.mxu0 0.0
        %1769 = vmatpush1.msra.mxu0 0.0
        %1770 = vmatprep.mubr.f32.mxu0 0.0
        %1771 = vmatmul.mubr.f32.gmra.mrb[0].mxu0 %v1704
        %v1772 = vpop.f32.mrb[0].mxu0
        %v1773 = vadd.f32 %v474, %v1772
        %v1774 = vpop.f32.mrb[0].mxu0
        %v1775 = vadd.f32 %v478, %v1774
        %1776 = vdwg.mxu0
        %v1777 = vmax.f32 %v1773, %v1775
        %1778 = vmax.xlane.f32.xlu0 %v1777
        %v1779 = vpop.xlane.xlu0 %1778
        %v1780 = vsub.f32 %v1773, %v1779
        %v1781 = vsub.f32 %v1775, %v1779
        %v1782 = vmul.f32 %v1780, 1.442695
        %v1783 = vpow.pop %v1782
        %v1784 = vmul.f32 %v1781, 1.442695
        %v1785 = vpow.pop %v1784
        %v1786 = vadd.f32 %v1783, %v1785
        %1787 = vadd.xlane.f32.xlu0 %v1786
        %v1788 = vpop.xlane.xlu0 %1787
        %v1789 = vlog2.pop %v1788
        %v1790 = vmul.f32 %v1789, 0.6931472
        %v1791 = vadd.f32 %v1779, %v1790
        %s1792 = scalar_lea.vmem %s318, 48
        %v1793 = vld [vmem:[%s1792] sm:$0xff]
        %1794 = vset.pattern.permute.xlu0 0
        %1795 = vperm.xlu0 %1794, %v1793
        %v1796 = vpop.permute.xlu0 %1795
        %vm1797 = vcmp.eq.s32.totalorder %v574, %v1796
        %vm1798 = vcmp.eq.s32.totalorder %v575, %v1796
        %v1799 = vsel %vm1797, %v1773, 0.0
        %v1800 = vsel %vm1798, %v1775, 0.0
        %v1801 = vadd.f32 %v1799, %v1800
        %1802 = vadd.xlane.f32.xlu0 %v1801
        %v1803 = vpop.xlane.xlu0 %1802
        %v1804 = vsub.f32 %v1803, %v1791
        %v1805 = vadd.f32 %v1602, %v1804
        %s1806 = scalar_lea.vmem %s278, 112 [#allocation2]
        %v1807 = vld [vmem:[%s1806] sm:$0xff]
        %v1808 = vld [vmem:[%s1806 + $0x8] sm:$0xff]
        %1809 = vmatprep.subr.mxu0 %v330
        %1810 = vmatpush1.msra.mxu0 %v329
        %1811 = vmatprep.subr.mxu0 %v332
        %1812 = vmatpush1.msra.mxu0 %v331
        %1813 = vmatprep.subr.mxu0 %v334
        %1814 = vmatpush1.msra.mxu0 %v333
        %1815 = vmatprep.subr.mxu0 %v336
        %1816 = vmatpush1.msra.mxu0 %v335
        %1817 = vmatprep.subr.mxu0 %v338
        %1818 = vmatpush1.msra.mxu0 %v337
        %1819 = vmatprep.subr.mxu0 %v340
        %1820 = vmatpush1.msra.mxu0 %v339
        %1821 = vmatprep.subr.mxu0 %v342
        %1822 = vmatpush1.msra.mxu0 %v341
        %1823 = vmatprep.subr.mxu0 %v344
        %1824 = vmatpush1.msra.mxu0 %v343
        %1825 = vmatprep.subr.mxu0 0.0
        %1826 = vmatpush1.msra.mxu0 0.0
        %1827 = vmatprep.subr.mxu0 0.0
        %1828 = vmatpush1.msra.mxu0 0.0
        %1829 = vmatprep.subr.mxu0 0.0
        %1830 = vmatpush1.msra.mxu0 0.0
        %1831 = vmatprep.subr.mxu0 0.0
        %1832 = vmatpush1.msra.mxu0 0.0
        %1833 = vmatprep.subr.mxu0 0.0
        %1834 = vmatpush1.msra.mxu0 0.0
        %1835 = vmatprep.subr.mxu0 0.0
        %1836 = vmatpush1.msra.mxu0 0.0
        %1837 = vmatprep.subr.mxu0 0.0
        %1838 = vmatpush1.msra.mxu0 0.0
        %1839 = vmatprep.subr.mxu0 0.0
        %1840 = vmatpush1.msra.mxu0 0.0
        %1841 = vmatprep.subr.mxu0 0.0
        %1842 = vmatpush1.msra.mxu0 0.0
        %1843 = vmatprep.subr.mxu0 0.0
        %1844 = vmatpush1.msra.mxu0 0.0
        %1845 = vmatprep.subr.mxu0 0.0
        %1846 = vmatpush1.msra.mxu0 0.0
        %1847 = vmatprep.subr.mxu0 0.0
        %1848 = vmatpush1.msra.mxu0 0.0
        %1849 = vmatprep.subr.mxu0 0.0
        %1850 = vmatpush1.msra.mxu0 0.0
        %1851 = vmatprep.subr.mxu0 0.0
        %1852 = vmatpush1.msra.mxu0 0.0
        %1853 = vmatprep.subr.mxu0 0.0
        %1854 = vmatpush1.msra.mxu0 0.0
        %1855 = vmatprep.subr.mxu0 0.0
        %1856 = vmatpush1.msra.mxu0 0.0
        %1857 = vmatprep.subr.mxu0 0.0
        %1858 = vmatpush1.msra.mxu0 0.0
        %1859 = vmatprep.subr.mxu0 0.0
        %1860 = vmatpush1.msra.mxu0 0.0
        %1861 = vmatprep.subr.mxu0 0.0
        %1862 = vmatpush1.msra.mxu0 0.0
        %1863 = vmatprep.subr.mxu0 0.0
        %1864 = vmatpush1.msra.mxu0 0.0
        %1865 = vmatprep.subr.mxu0 0.0
        %1866 = vmatpush1.msra.mxu0 0.0
        %1867 = vmatprep.subr.mxu0 0.0
        %1868 = vmatpush1.msra.mxu0 0.0
        %1869 = vmatprep.subr.mxu0 0.0
        %1870 = vmatpush1.msra.mxu0 0.0
        %1871 = vmatprep.subr.mxu0 0.0
        %1872 = vmatpush1.msra.mxu0 0.0
        %1873 = vmatprep.mubr.f32.mxu0 0.0
        %1874 = vmatmul.mubr.f32.gmra.mrb[0].mxu0 %v1704
        %v1875 = vpop.f32.mrb[0].mxu0
        %v1876 = vadd.f32 0.0, %v1875
        %v1877 = vpop.f32.mrb[0].mxu0
        %v1878 = vadd.f32 0.0, %v1877
        %1879 = vdwg.mxu0
        %v1880 = vadd.f32 %v1807, %v1876
        %v1881 = vadd.f32 %v1808, %v1878
        %v1882 = vxor.u32 %v1880, 2147483648
        %v1883 = vmul.f32 %v1882, 1.442695
        %v1884 = vpow.pop %v1883
        %v1885 = vadd.f32 %v1884, 1.0
        %v1886 = vrcp.pop %v1885
        %v1887 = vmul.f32 1.0, %v1886
        %v1888 = vtanh.pop %v1881
        %v1889 = vxor.u32 %v1881, 2147483648
        %v1890 = vmul.f32 %v1889, 1.442695
        %v1891 = vpow.pop %v1890
        %v1892 = vadd.f32 %v1891, 1.0
        %v1893 = vrcp.pop %v1892
        %v1894 = vmul.f32 1.0, %v1893
        %v1895 = vmul.f32 %v1887, %v1698
        %v1896 = vmul.f32 %v1887, %v1888
        %1898 = vrot.lane.b32.xlu0 %v1896, 64
        %v1899 = vpop.permute.xlu0 %1898
        %v1901 = vadd.f32 %v1895, %v1899
        %v1902 = vtanh.pop %v1901
        %v1903 = vmul.f32 %v1894, %v1902
        %1905 = vrot.lane.b32.xlu0 %v1903, 64
        %v1906 = vpop.permute.xlu0 %1905
        %v1907 = vsel %vm367, %v1906, 0
        %1909 = vmatprep.subr.mxu0 %v346
        %1910 = vmatpush1.msra.mxu0 %v345
        %1911 = vmatprep.subr.mxu0 %v348
        %1912 = vmatpush1.msra.mxu0 %v347
        %1913 = vmatprep.subr.mxu0 %v350
        %1914 = vmatpush1.msra.mxu0 %v349
        %1915 = vmatprep.subr.mxu0 %v352
        %1916 = vmatpush1.msra.mxu0 %v351
        %1917 = vmatprep.subr.mxu0 %v354
        %1918 = vmatpush1.msra.mxu0 %v353
        %1919 = vmatprep.subr.mxu0 %v356
        %1920 = vmatpush1.msra.mxu0 %v355
        %1921 = vmatprep.subr.mxu0 %v358
        %1922 = vmatpush1.msra.mxu0 %v357
        %1923 = vmatprep.subr.mxu0 %v360
        %1924 = vmatpush1.msra.mxu0 %v359
        %1925 = vmatprep.subr.mxu0 0.0
        %1926 = vmatpush1.msra.mxu0 0.0
        %1927 = vmatprep.subr.mxu0 0.0
        %1928 = vmatpush1.msra.mxu0 0.0
        %1929 = vmatprep.subr.mxu0 0.0
        %1930 = vmatpush1.msra.mxu0 0.0
        %1931 = vmatprep.subr.mxu0 0.0
        %1932 = vmatpush1.msra.mxu0 0.0
        %1933 = vmatprep.subr.mxu0 0.0
        %1934 = vmatpush1.msra.mxu0 0.0
        %1935 = vmatprep.subr.mxu0 0.0
        %1936 = vmatpush1.msra.mxu0 0.0
        %1937 = vmatprep.subr.mxu0 0.0
        %1938 = vmatpush1.msra.mxu0 0.0
        %1939 = vmatprep.subr.mxu0 0.0
        %1940 = vmatpush1.msra.mxu0 0.0
        %1941 = vmatprep.subr.mxu0 0.0
        %1942 = vmatpush1.msra.mxu0 0.0
        %1943 = vmatprep.subr.mxu0 0.0
        %1944 = vmatpush1.msra.mxu0 0.0
        %1945 = vmatprep.subr.mxu0 0.0
        %1946 = vmatpush1.msra.mxu0 0.0
        %1947 = vmatprep.subr.mxu0 0.0
        %1948 = vmatpush1.msra.mxu0 0.0
        %1949 = vmatprep.subr.mxu0 0.0
        %1950 = vmatpush1.msra.mxu0 0.0
        %1951 = vmatprep.subr.mxu0 0.0
        %1952 = vmatpush1.msra.mxu0 0.0
        %1953 = vmatprep.subr.mxu0 0.0
        %1954 = vmatpush1.msra.mxu0 0.0
        %1955 = vmatprep.subr.mxu0 0.0
        %1956 = vmatpush1.msra.mxu0 0.0
        %1957 = vmatprep.subr.mxu0 0.0
        %1958 = vmatpush1.msra.mxu0 0.0
        %1959 = vmatprep.subr.mxu0 0.0
        %1960 = vmatpush1.msra.mxu0 0.0
        %1961 = vmatprep.subr.mxu0 0.0
        %1962 = vmatpush1.msra.mxu0 0.0
        %1963 = vmatprep.subr.mxu0 0.0
        %1964 = vmatpush1.msra.mxu0 0.0
        %1965 = vmatprep.subr.mxu0 0.0
        %1966 = vmatpush1.msra.mxu0 0.0
        %1967 = vmatprep.subr.mxu0 0.0
        %1968 = vmatpush1.msra.mxu0 0.0
        %1969 = vmatprep.subr.mxu0 0.0
        %1970 = vmatpush1.msra.mxu0 0.0
        %1971 = vmatprep.subr.mxu0 0.0
        %1972 = vmatpush1.msra.mxu0 0.0
        %1973 = vmatprep.mubr.f32.mxu0 0.0
        %1974 = vmatmul.mubr.f32.gmra.mrb[0].mxu0 %v1907
        %v1975 = vpop.f32.mrb[0].mxu0
        %v1976 = vadd.f32 %v474, %v1975
        %v1977 = vpop.f32.mrb[0].mxu0
        %v1978 = vadd.f32 %v478, %v1977
        %1979 = vdwg.mxu0
        %v1980 = vmax.f32 %v1976, %v1978
        %1981 = vmax.xlane.f32.xlu0 %v1980
        %v1982 = vpop.xlane.xlu0 %1981
        %v1983 = vsub.f32 %v1976, %v1982
        %v1984 = vsub.f32 %v1978, %v1982
        %v1985 = vmul.f32 %v1983, 1.442695
        %v1986 = vpow.pop %v1985
        %v1987 = vmul.f32 %v1984, 1.442695
        %v1988 = vpow.pop %v1987
        %v1989 = vadd.f32 %v1986, %v1988
        %1990 = vadd.xlane.f32.xlu0 %v1989
        %v1991 = vpop.xlane.xlu0 %1990
        %v1992 = vlog2.pop %v1991
        %v1993 = vmul.f32 %v1992, 0.6931472
        %v1994 = vadd.f32 %v1982, %v1993
        %s1995 = scalar_lea.vmem %s318, 56
        %v1996 = vld [vmem:[%s1995] sm:$0xff]
        %1997 = vset.pattern.permute.xlu0 0
        %1998 = vperm.xlu0 %1997, %v1996
        %v1999 = vpop.permute.xlu0 %1998
        %vm2000 = vcmp.eq.s32.totalorder %v574, %v1999
        %vm2001 = vcmp.eq.s32.totalorder %v575, %v1999
        %v2002 = vsel %vm2000, %v1976, 0.0
        %v2003 = vsel %vm2001, %v1978, 0.0
        %v2004 = vadd.f32 %v2002, %v2003
        %2005 = vadd.xlane.f32.xlu0 %v2004
        %v2006 = vpop.xlane.xlu0 %2005
        %v2007 = vsub.f32 %v2006, %v1994
        %v2008 = vadd.f32 %v1805, %v2007
        %2010 = vst.msk [vmem:[#allocation7] sm:$0xff] %vm367, %v1906
        %2012 = vrot.lane.b32.xlu0 %v1901, 64
        %v2013 = vpop.permute.xlu0 %2012
        %2015 = vst.msk [vmem:[#allocation8] sm:$0xff] %vm367, %v2013
        %vm2016 = vcmask 7168
        %2017 = vst.msk [vmem:[%s5] sm:$0xff] %vm2016, %v2008
        %p2018 = scmp.eq.s32.totalorder %s25, 1
        // Predicated region
        $region53: #{tpu_custom_call.1} parent=39 // pred_check
          %p2019 = pneg %p2018
        $region54: #{tpu_custom_call.1} parent=39 // pred_check_branch
          %2021 = sbr.rel (%p2019) target = $region56
        $region55: #{tpu_custom_call.1} parent=39 // pred_region
          %v2022 = vld [vmem:[%s5] sm:$0xff]
          %v2023 = vrcp.pop 16.0
          %v2024 = vmul.f32 %v2022, %v2023
          %2025 = vst.msk [vmem:[%s5] sm:$0xff] %vm2016, %v2024
        $region56: #{tpu_custom_call.1} parent=39 // pred_fallthru
          _
        // Predicated region
        $region57: #{tpu_custom_call.1} parent=39 // pred_check
          %p2026 = pneg %p153
        $region58: #{tpu_custom_call.1} parent=39 // pred_check_branch
          %2028 = sbr.rel (%p2026) target = $region60
        $region59: #{tpu_custom_call.1} parent=39 // pred_region
          _
        $region60: #{tpu_custom_call.1} parent=39 // pred_fallthru
          _
        // Predicated region
        $region61: #{tpu_custom_call.1} parent=39 // pred_check
          %p2029 = pneg %p174
        $region62: #{tpu_custom_call.1} parent=39 // pred_check_branch
          %2031 = sbr.rel (%p2029) target = $region64
        $region63: #{tpu_custom_call.1} parent=39 // pred_region
          %s2033 = ssub.s32 128, 128
          %2034 = vsyncadd [#allocation4], %s2033
          %s2036 = sshll.u32 [#allocation7], 4
          %s2037 = int_to_ptr.vmem [resolvable:$true] %s2036
          %2039 = dma.vmem_to_hbm [thread:$0]  %s2037, 128, %s6, [#allocation4]
        $region64: #{tpu_custom_call.1} parent=39 // pred_fallthru
          _
        // Predicated region
        $region65: #{tpu_custom_call.1} parent=39 // pred_check
          %p2040 = pneg %p195
        $region66: #{tpu_custom_call.1} parent=39 // pred_check_branch
          %2042 = sbr.rel (%p2040) target = $region68
        $region67: #{tpu_custom_call.1} parent=39 // pred_region
          %s2044 = ssub.s32 128, 128
          %2045 = vsyncadd [#allocation9], %s2044
          %s2047 = sshll.u32 [#allocation8], 4
          %s2048 = int_to_ptr.vmem [resolvable:$true] %s2047
          %2050 = dma.vmem_to_hbm [thread:$0]  %s2048, 128, %s7, [#allocation9]
        $region68: #{tpu_custom_call.1} parent=39 // pred_fallthru
          _
        // Predicated region
        $region69: #{tpu_custom_call.1} parent=39 // pred_check
          %p2051 = pneg %p153
        $region70: #{tpu_custom_call.1} parent=39 // pred_check_branch
          %2053 = sbr.rel (%p2051) target = $region72
        $region71: #{tpu_custom_call.1} parent=39 // pred_region
          _
        $region72: #{tpu_custom_call.1} parent=39 // pred_fallthru
          _
        // Predicated region
        $region73: #{tpu_custom_call.1} parent=39 // pred_check
          %p2054 = pneg %p174
        $region74: #{tpu_custom_call.1} parent=39 // pred_check_branch
          %2056 = sbr.rel (%p2054) target = $region76
        $region75: #{tpu_custom_call.1} parent=39 // pred_region
          %2057 = dma.done [#allocation4], 128
        $region76: #{tpu_custom_call.1} parent=39 // pred_fallthru
          _
        // Predicated region
        $region77: #{tpu_custom_call.1} parent=39 // pred_check
          %p2058 = pneg %p195
        $region78: #{tpu_custom_call.1} parent=39 // pred_check_branch
          %2060 = sbr.rel (%p2058) target = $region80
        $region79: #{tpu_custom_call.1} parent=39 // pred_region
          %2061 = dma.done [#allocation9], 128
        $region80: #{tpu_custom_call.1} parent=39 // pred_fallthru
          _
      $region40: #{tpu_custom_call.1} parent=5 // pred_fallthru
        _
      %p2062 = scmp.le.s32.totalorder 2, %s20
      // Predicated region
      $region81: #{tpu_custom_call.1} parent=5 // pred_check
        %p2063 = pneg %p2062
      $region82: #{tpu_custom_call.1} parent=5 // pred_check_branch
        %2065 = sbr.rel (%p2063) target = $region84
      $region83: #{tpu_custom_call.1} parent=5 // pred_region
        %s2066 = ssub.s32 %s20, 2
      $region84: #{tpu_custom_call.1} parent=5 // pred_fallthru
        _
    $region6: #{tpu_custom_call.1} parent=1 // loop_footer
      %s24 = sadd.s32 1, %s20
    $region7: #{tpu_custom_call.1} parent=1 // loop_footer_branch
      %19 = sbr.rel target = $region3
    $region8: #{tpu_custom_call.1} parent=1 // loop_exit
      _
    %2067 = vsyncpa [#allocation3], 1
    %s2068 = scalar_lea.sflag [#allocation3], 1
    %2069 = vsyncpa %s2068, 1
    %2070 = vsyncpa [#allocation6], 1
    %2071 = vsyncpa [#allocation4], 1
    %s2072 = scalar_lea.sflag [#allocation4], 1
    %2073 = vsyncpa %s2072, 1
    %2074 = vsyncpa [#allocation9], 1

</llo_original>
